<compile_context>
chip_gen: v7x
topology: tpu7x:2x2x1
jax: 0.10.0
libtpu: 0.0.40
codegen_flags: <defaults>
</compile_context>

<pallas_src>
import math

import jax
import jax.numpy as jnp
from jax.experimental import pallas as pl
from jax.experimental.pallas import tpu as pltpu

_EPS = 1e-5        # nn.GroupNorm default eps
_SLOPE = 0.1       # nn.LeakyReLU(negative_slope=0.1)
_LANES = 128


def _round_up(x, m):
    return (x + m - 1) // m * m


# ----------------------------------------------------------------------------
# Kernel A: KPConv on one tile of query points (+ per-tile GroupNorm partials)
# ----------------------------------------------------------------------------
def _make_kpconv_kernel(sigma, tm, h_pad, k_pad, kc_pad, m_real):
    inv_sigma = 1.0 / float(sigma)

    def kernel(rel_ref, nf_ref, inv_ref, kpc_ref, w_ref, b_ref, o_ref, stats_ref):
        # ---- kernel-point influence weights, computed directly in the
        #      lane-expanded (k*Cin + c) layout (lane-dense, no K loop).
        rel = rel_ref[...]                                    # (tm*h_pad, 3) f32
        rx, ry, rz = rel[:, 0:1], rel[:, 1:2], rel[:, 2:3]    # (tm*h_pad, 1)
        kpc = kpc_ref[...]                                    # (4, kc_pad) f32
        kpx, kpy, kpz, kpsq = (kpc[0:1, :], kpc[1:2, :], kpc[2:3, :], kpc[3:4, :])
        dots = rx * kpx + ry * kpy + rz * kpz                 # (tm*h_pad, kc_pad)
        rel_sq = rx * rx + ry * ry + rz * rz                  # (tm*h_pad, 1)
        # NOTE: expansion form of ||rel - kp||^2; slightly less accurate than a
        # direct (diff**2).sum for near-zero distances, clamped at 0.
        sq = jnp.maximum(rel_sq + kpsq - 2.0 * dots, 0.0)
        wgt = jnp.maximum(1.0 - jnp.sqrt(sq) * inv_sigma, 0.0)  # (tm*h_pad, kc_pad)

        # ---- fused, lane-dense aggregation: replicate the (rows, Cin) neighbor
        #      features across the k_pad kernel points along lanes, one VPU
        #      multiply, then a sublane-group reduce over the neighbor axis
        #      (reshape only splits leading rows; the minor dim is unchanged).
        nf = nf_ref[...].astype(jnp.float32)                  # (tm*h_pad, Cin)
        nf_rep = jnp.concatenate([nf] * k_pad, axis=-1)       # (tm*h_pad, kc_pad)
        x = wgt * nf_rep                                      # (tm*h_pad, kc_pad) f32
        wf = jnp.sum(x.reshape(tm, h_pad, kc_pad), axis=1)    # (tm, kc_pad) f32

        # ---- one deep MXU contraction (bf16 operands, f32 accumulation).
        out = jnp.dot(wf.astype(jnp.bfloat16), w_ref[...],
                      preferred_element_type=jnp.float32)     # (tm, Dp) f32

        # ---- neighbor-count normalisation (f32 reciprocal precomputed in the
        #      wrapper with PyTorch's "feature-sum > 0" rule) + bias.
        y = out * inv_ref[...] + b_ref[...]                   # (tm, Dp) f32
        o_ref[...] = y.astype(jnp.bfloat16)

        # ---- per-tile GroupNorm partial sums (padded query rows masked out).
        rows = (pl.program_id(0) * tm
                + jax.lax.broadcasted_iota(jnp.int32, (tm, 1), 0))
        ym = jnp.where(rows < m_real, y, 0.0)
        stats_ref[0, 0:1, :] = jnp.sum(ym, axis=0, keepdims=True)
        stats_ref[0, 1:2, :] = jnp.sum(ym * ym, axis=0, keepdims=True)

    return kernel


# ----------------------------------------------------------------------------
# Kernel B: elementwise GroupNorm apply (scale/shift precomputed) + LeakyReLU
# ----------------------------------------------------------------------------
def _make_gn_leaky_kernel(slope):
    def kernel(x_ref, scale_ref, shift_ref, o_ref):
        y = x_ref[...].astype(jnp.float32) * scale_ref[...] + shift_ref[...]
        o_ref[...] = jnp.where(y >= 0.0, y, slope * y)

    return kernel


# ----------------------------------------------------------------------------
# Tiling: keep the double-buffered streamed blocks + lane-dense temporaries
# inside a conservative VMEM budget (v7x has 64 MiB physical), and keep >= 2
# grid tiles so both v7x TensorCores get work on the "parallel" axis.
# ----------------------------------------------------------------------------
def _pick_tile_and_vmem(M, h_pad, Cin, kc_pad, Dp, block_m):
    def est(t):
        th = t * h_pad
        stream = 2 * (th * _LANES * 4                 # rel block (lane padded)
                      + th * max(Cin, _LANES) * 2     # neighbor features (bf16)
                      + t * _LANES * 4                # 1 / neighbor count
                      + t * Dp * 2                    # conv output tile (bf16)
                      + 2 * Dp * 4)                   # stats tile
        resident = kc_pad * Dp * 2 + 4 * kc_pad * 4 + Dp * 4
        temps = 3 * th * kc_pad * 4 + 2 * t * kc_pad * 4 + 2 * t * Dp * 4
        return stream + resident + temps

    budget = 24 * 1024 * 1024
    tm = max(16, min(_round_up(block_m, 16), _round_up(M, 16)))
    while tm > 16 and est(tm) > budget:
        tm = max(16, _round_up(tm // 2, 16))
    if tm >= M and M > 8:          # don't collapse the grid to a single tile
        tm = max(16, _round_up(_round_up(M, 16) // 2, 16))
    vmem_limit = int(min(64 * 1024 * 1024, max(32 * 1024 * 1024, 2 * est(tm))))
    return tm, vmem_limit


# ----------------------------------------------------------------------------
# ConvBlock forward
# ----------------------------------------------------------------------------
def conv_block_forward(params, s_feats, q_points, s_points, neighbor_indices,
                       *, num_groups, sigma, block_m=256):
    """KPConv -> GroupNorm -> LeakyReLU -> unsqueeze(1) (ConvBlock.forward)."""
    N, Cin = s_feats.shape
    M, H = neighbor_indices.shape
    kernel_points = params["kernel_points"]                     # (K, 3)
    weights = params["weights"]                                 # (K, Cin, D)
    K = kernel_points.shape[0]
    D = weights.shape[-1]
    assert D % num_groups == 0, "out_channels must be divisible by group_norm"

    # Padded sizes: kernel points are padded so the flattened contraction axis
    # (k_pad*Cin) is a multiple of 128, output channels are padded to 128 so
    # every store is a full-lane vst, and neighbors are padded to a multiple of
    # 8 so the in-kernel neighbor reduce is a pure sublane-group reduce.
    k_pad = _round_up(K, _LANES // math.gcd(Cin, _LANES))
    kc_pad = k_pad * Cin
    Dp = _round_up(D, _LANES)
    h_pad = _round_up(H, 8)

    tm, vmem_limit = _pick_tile_and_vmem(M, h_pad, Cin, kc_pad, Dp, block_m)
    m_pad = _round_up(M, tm)
    n_tiles = m_pad // tm

    # ---- neighbor gather (XLA).  Missing neighbors (index == N) get zero
    # features, so their contribution AND their vote in the neighbor count are
    # zero -- identical to the PyTorch padding-row semantics.
    valid = (neighbor_indices < N)[..., None]                   # (M, H, 1)
    idx = jnp.minimum(neighbor_indices, N - 1).astype(jnp.int32)
    feats = jnp.where(valid, s_feats[idx], 0.0).astype(jnp.float32)    # (M, H, Cin)
    rel = (s_points[idx] - q_points[:, None, :]).astype(jnp.float32)   # (M, H, 3)

    # exact PyTorch normalisation rule, evaluated in f32 before the bf16 cast:
    # count neighbors whose gathered feature-sum is > 0 (at least 1).
    nsum = jnp.sum(feats, axis=-1)                              # (M, H)
    ncount = jnp.maximum(jnp.sum((nsum > 0.0).astype(jnp.float32), axis=-1), 1.0)
    inv_n = (1.0 / ncount).reshape(M, 1)                        # (M, 1) f32

    # flatten per-neighbor rows; bf16 features halve the dominant HBM stream.
    if h_pad != H:
        feats = jnp.pad(feats, ((0, 0), (0, h_pad - H), (0, 0)))
        rel = jnp.pad(rel, ((0, 0), (0, h_pad - H), (0, 0)))
    nf_rows = feats.astype(jnp.bfloat16).reshape(M * h_pad, Cin)
    rel_rows = rel.reshape(M * h_pad, 3)
    if m_pad != M:
        pad_r = (m_pad - M) * h_pad
        nf_rows = jnp.pad(nf_rows, ((0, pad_r), (0, 0)))
        rel_rows = jnp.pad(rel_rows, ((0, pad_r), (0, 0)))
        inv_n = jnp.pad(inv_n, ((0, m_pad - M), (0, 0)))

    # ---- constants: kernel-point xyz / |kp|^2 replicated to the (k*Cin + c)
    # lane layout, and the KPConv weights flattened / zero-padded (padded rows
    # and padded output channels contribute exactly zero).
    kp = jnp.zeros((k_pad, 3), jnp.float32).at[:K].set(kernel_points.astype(jnp.float32))
    kpc = jnp.concatenate([kp.T, jnp.sum(kp * kp, axis=1)[None, :]], axis=0)   # (4, k_pad)
    kpc = jnp.repeat(kpc, Cin, axis=1)                          # (4, kc_pad)

    w_flat = jnp.zeros((k_pad, Cin, Dp), jnp.float32)
    w_flat = w_flat.at[:K, :, :D].set(weights.astype(jnp.float32))
    w_flat = w_flat.reshape(kc_pad, Dp).astype(jnp.bfloat16)
    bias = jnp.zeros((1, Dp), jnp.float32).at[0, :D].set(params["bias"].astype(jnp.float32))

    cparams = pltpu.CompilerParams(dimension_semantics=("parallel",),
                                   vmem_limit_bytes=vmem_limit)

    conv_out, stats = pl.pallas_call(
        _make_kpconv_kernel(sigma, tm, h_pad, k_pad, kc_pad, M),
        out_shape=(jax.ShapeDtypeStruct((m_pad, Dp), jnp.bfloat16),
                   jax.ShapeDtypeStruct((n_tiles, 2, Dp), jnp.float32)),
        grid=(n_tiles,),
        in_specs=[
            pl.BlockSpec((tm * h_pad, 3), lambda i: (i, 0)),     # relative positions
            pl.BlockSpec((tm * h_pad, Cin), lambda i: (i, 0)),   # neighbor feats (bf16)
            pl.BlockSpec((tm, 1), lambda i: (i, 0)),             # 1 / neighbor count
            pl.BlockSpec((4, kc_pad), lambda i: (0, 0)),         # kernel-point constants
            pl.BlockSpec((kc_pad, Dp), lambda i: (0, 0)),        # flattened weights (resident)
            pl.BlockSpec((1, Dp), lambda i: (0, 0)),             # bias
        ],
        out_specs=(pl.BlockSpec((tm, Dp), lambda i: (i, 0)),
                   pl.BlockSpec((1, 2, Dp), lambda i: (i, 0, 0))),
        compiler_params=cparams,
    )(rel_rows, nf_rows, inv_n, kpc, w_flat, bias)

    # ---- GroupNorm finalise (hoisted out of the kernels): reduce the tiny
    # per-tile partial sums once and build per-channel scale / shift.
    dpg = D // num_groups
    tot = jnp.sum(stats, axis=0)                                 # (2, Dp)
    cnt = float(M * dpg)
    mean_g = jnp.sum(tot[0, :D].reshape(num_groups, dpg), axis=-1) / cnt
    msq_g = jnp.sum(tot[1, :D].reshape(num_groups, dpg), axis=-1) / cnt
    var_g = jnp.maximum(msq_g - mean_g * mean_g, 0.0)            # E[x^2]-E[x]^2 (f32)
    inv_g = jax.lax.rsqrt(var_g + _EPS)
    mean_c = jnp.repeat(mean_g, dpg)
    inv_c = jnp.repeat(inv_g, dpg)
    gamma = params["gamma"].astype(jnp.float32)
    beta = params["beta"].astype(jnp.float32)
    scale_c = gamma * inv_c
    shift_c = beta - mean_c * scale_c
    scale = jnp.zeros((1, Dp), jnp.float32).at[0, :D].set(scale_c)
    shift = jnp.zeros((1, Dp), jnp.float32).at[0, :D].set(shift_c)

    out = pl.pallas_call(
        _make_gn_leaky_kernel(_SLOPE),
        out_shape=jax.ShapeDtypeStruct((m_pad, Dp), jnp.float32),
        grid=(n_tiles,),
        in_specs=[
            pl.BlockSpec((tm, Dp), lambda i: (i, 0)),            # conv output tile (bf16)
            pl.BlockSpec((1, Dp), lambda i: (0, 0)),             # per-channel scale
            pl.BlockSpec((1, Dp), lambda i: (0, 0)),             # per-channel shift
        ],
        out_specs=pl.BlockSpec((tm, Dp), lambda i: (i, 0)),
        compiler_params=cparams,
    )(conv_out, scale, shift)

    return out[:M, :D][:, None, :]              # ConvBlock returns x.unsqueeze(1)


# ----------------------------------------------------------------------------
# main
# ----------------------------------------------------------------------------
if __name__ == "__main__":
    N, H = 32, 8                       # support points, neighbors per query point
    K = 15                             # kernel points
    in_channels, out_channels = 16, 64
    group_norm = 8
    radius, sigma = 0.8, 0.5

    root = jax.random.PRNGKey(0)
    k_feat, k_pts, k_idx, k_kpp, k_kpw, k_kpb = jax.random.split(root, 6)

    s_feats = jax.random.normal(k_feat, (N, in_channels), jnp.float32)
    s_points = jax.random.uniform(k_pts, (N, 3), jnp.float32, minval=-1.0, maxval=1.0)
    q_points = s_points                # ConvBlock is used with q_points == s_points
    neighbor_indices = jax.random.randint(k_idx, (N, H), 0, N + 1).astype(jnp.int32)

    params = dict(
        kernel_points=radius * jax.random.uniform(k_kpp, (K, 3), jnp.float32,
                                                  minval=-1.0, maxval=1.0),
        weights=jax.random.normal(k_kpw, (K, in_channels, out_channels), jnp.float32)
                / math.sqrt(K * in_channels),
        bias=0.01 * jax.random.normal(k_kpb, (out_channels,), jnp.float32),
        gamma=jnp.ones((out_channels,), jnp.float32),
        beta=jnp.zeros((out_channels,), jnp.float32),
    )

    out = conv_block_forward(params, s_feats, q_points, s_points, neighbor_indices,
                             num_groups=group_norm, sigma=sigma)
    out = jax.block_until_ready(out)
    assert out.shape == (N, 1, out_channels), out.shape
    assert bool(jnp.all(jnp.isfinite(out)))
    print("KERNEL_OK")
</pallas_src>

<mosaic_0001>
module attributes {stable_mosaic.version = 11 : i64} {
  func.func @kernel(%arg0: i32, %arg1: memref<128x3xf32, #tpu.memory_space<vmem>>, %arg2: memref<128x16xbf16, #tpu.memory_space<vmem>>, %arg3: memref<16x1xf32, #tpu.memory_space<vmem>>, %arg4: memref<4x256xf32, #tpu.memory_space<vmem>>, %arg5: memref<256x128xbf16, #tpu.memory_space<vmem>>, %arg6: memref<1x128xf32, #tpu.memory_space<vmem>>, %arg7: memref<16x128xbf16, #tpu.memory_space<vmem>>, %arg8: memref<1x2x128xf32, #tpu.memory_space<vmem>>) attributes {dimension_semantics = [#tpu.dimension_semantics<parallel>], iteration_bounds = array<i64: 2>, scalar_prefetch = 0 : i64, scratch_operands = 0 : i64, tpu.core_type = #tpu.core_type<tc>, window_params = [{transform_indices = @transform_0, window_bounds = array<i64: 128, 3>}, {transform_indices = @transform_1, window_bounds = array<i64: 128, 16>}, {transform_indices = @transform_2, window_bounds = array<i64: 16, 1>}, {pipeline_mode = #tpu.pipeline_mode<synchronous>, transform_indices = @transform_3, window_bounds = array<i64: 4, 256>}, {pipeline_mode = #tpu.pipeline_mode<synchronous>, transform_indices = @transform_4, window_bounds = array<i64: 256, 128>}, {pipeline_mode = #tpu.pipeline_mode<synchronous>, transform_indices = @transform_5, window_bounds = array<i64: 1, 128>}, {transform_indices = @transform_6, window_bounds = array<i64: 16, 128>}, {transform_indices = @transform_7, window_bounds = array<i64: 1, 2, 128>}]} {
    %c0 = arith.constant 0 : index
    %c0_0 = arith.constant 0 : index
    %0 = vector.load %arg1[%c0, %c0_0] : memref<128x3xf32, #tpu.memory_space<vmem>>, vector<128x3xf32>
    %1 = vector.extract_strided_slice %0 {offsets = [0, 0], sizes = [128, 1], strides = [1, 1]} : vector<128x3xf32> to vector<128x1xf32>
    %2 = vector.extract_strided_slice %0 {offsets = [0, 1], sizes = [128, 1], strides = [1, 1]} : vector<128x3xf32> to vector<128x1xf32>
    %3 = vector.extract_strided_slice %0 {offsets = [0, 2], sizes = [128, 1], strides = [1, 1]} : vector<128x3xf32> to vector<128x1xf32>
    %c0_1 = arith.constant 0 : index
    %c0_2 = arith.constant 0 : index
    %4 = vector.load %arg4[%c0_1, %c0_2] : memref<4x256xf32, #tpu.memory_space<vmem>>, vector<4x256xf32>
    %5 = vector.extract_strided_slice %4 {offsets = [0, 0], sizes = [1, 256], strides = [1, 1]} : vector<4x256xf32> to vector<1x256xf32>
    %6 = vector.extract_strided_slice %4 {offsets = [1, 0], sizes = [1, 256], strides = [1, 1]} : vector<4x256xf32> to vector<1x256xf32>
    %7 = vector.extract_strided_slice %4 {offsets = [2, 0], sizes = [1, 256], strides = [1, 1]} : vector<4x256xf32> to vector<1x256xf32>
    %8 = vector.extract_strided_slice %4 {offsets = [3, 0], sizes = [1, 256], strides = [1, 1]} : vector<4x256xf32> to vector<1x256xf32>
    %9 = vector.broadcast %1 : vector<128x1xf32> to vector<128x256xf32>
    %10 = vector.broadcast %5 : vector<1x256xf32> to vector<128x256xf32>
    %11 = arith.mulf %9, %10 : vector<128x256xf32>
    %12 = vector.broadcast %2 : vector<128x1xf32> to vector<128x256xf32>
    %13 = vector.broadcast %6 : vector<1x256xf32> to vector<128x256xf32>
    %14 = arith.mulf %12, %13 : vector<128x256xf32>
    %15 = arith.addf %11, %14 : vector<128x256xf32>
    %16 = vector.broadcast %3 : vector<128x1xf32> to vector<128x256xf32>
    %17 = vector.broadcast %7 : vector<1x256xf32> to vector<128x256xf32>
    %18 = arith.mulf %16, %17 : vector<128x256xf32>
    %19 = arith.addf %15, %18 : vector<128x256xf32>
    %20 = arith.mulf %1, %1 : vector<128x1xf32>
    %21 = arith.mulf %2, %2 : vector<128x1xf32>
    %22 = arith.addf %20, %21 : vector<128x1xf32>
    %23 = arith.mulf %3, %3 : vector<128x1xf32>
    %24 = arith.addf %22, %23 : vector<128x1xf32>
    %25 = vector.broadcast %24 : vector<128x1xf32> to vector<128x256xf32>
    %26 = vector.broadcast %8 : vector<1x256xf32> to vector<128x256xf32>
    %27 = arith.addf %25, %26 : vector<128x256xf32>
    %cst = arith.constant 2.000000e+00 : f32
    %28 = vector.broadcast %cst : f32 to vector<128x256xf32>
    %29 = arith.mulf %28, %19 : vector<128x256xf32>
    %30 = arith.subf %27, %29 : vector<128x256xf32>
    %cst_3 = arith.constant 0.000000e+00 : f32
    %31 = vector.broadcast %cst_3 : f32 to vector<128x256xf32>
    %32 = arith.maximumf %30, %31 : vector<128x256xf32>
    %33 = math.sqrt %32 : vector<128x256xf32>
    %cst_4 = arith.constant 2.000000e+00 : f32
    %34 = vector.broadcast %cst_4 : f32 to vector<128x256xf32>
    %35 = arith.mulf %33, %34 : vector<128x256xf32>
    %cst_5 = arith.constant 1.000000e+00 : f32
    %36 = vector.broadcast %cst_5 : f32 to vector<128x256xf32>
    %37 = arith.subf %36, %35 : vector<128x256xf32>
    %cst_6 = arith.constant 0.000000e+00 : f32
    %38 = vector.broadcast %cst_6 : f32 to vector<128x256xf32>
    %39 = arith.maximumf %37, %38 : vector<128x256xf32>
    %c0_7 = arith.constant 0 : index
    %c0_8 = arith.constant 0 : index
    %40 = vector.load %arg2[%c0_7, %c0_8] : memref<128x16xbf16, #tpu.memory_space<vmem>>, vector<128x16xbf16>
    %41 = arith.extf %40 : vector<128x16xbf16> to vector<128x16xf32>
    %42 = tpu.concatenate %41, %41, %41, %41, %41, %41, %41, %41, %41, %41, %41, %41, %41, %41, %41, %41 in 1 : vector<128x16xf32>, vector<128x16xf32>, vector<128x16xf32>, vector<128x16xf32>, vector<128x16xf32>, vector<128x16xf32>, vector<128x16xf32>, vector<128x16xf32>, vector<128x16xf32>, vector<128x16xf32>, vector<128x16xf32>, vector<128x16xf32>, vector<128x16xf32>, vector<128x16xf32>, vector<128x16xf32>, vector<128x16xf32> -> vector<128x256xf32>
    %43 = arith.mulf %39, %42 : vector<128x256xf32>
    %44 = vector.shape_cast %43 : vector<128x256xf32> to vector<16x8x256xf32>
    %cst_9 = arith.constant dense<0.000000e+00> : vector<16x256xf32>
    %45 = vector.multi_reduction <add>, %44, %cst_9 [1] : vector<16x8x256xf32> to vector<16x256xf32>
    %46 = arith.truncf %45 : vector<16x256xf32> to vector<16x256xbf16>
    %c0_10 = arith.constant 0 : index
    %c0_11 = arith.constant 0 : index
    %47 = vector.load %arg5[%c0_10, %c0_11] : memref<256x128xbf16, #tpu.memory_space<vmem>>, vector<256x128xbf16>
    %cst_12 = arith.constant dense<0.000000e+00> : vector<16x128xf32>
    %48 = tpu.matmul %46, %47, %cst_12 {dimension_numbers = #tpu.dot_dimension_numbers<[1], [0], [0], [1], [0, 0, 1, 1], [], []>} : vector<16x256xbf16>, vector<256x128xbf16>, vector<16x128xf32> -> vector<16x128xf32>
    %c0_13 = arith.constant 0 : index
    %c0_14 = arith.constant 0 : index
    %49 = vector.load %arg3[%c0_13, %c0_14] : memref<16x1xf32, #tpu.memory_space<vmem>>, vector<16x1xf32>
    %50 = vector.broadcast %49 : vector<16x1xf32> to vector<16x128xf32>
    %51 = arith.mulf %48, %50 : vector<16x128xf32>
    %c0_15 = arith.constant 0 : index
    %c0_16 = arith.constant 0 : index
    %52 = vector.load %arg6[%c0_15, %c0_16] : memref<1x128xf32, #tpu.memory_space<vmem>>, vector<1x128xf32>
    %53 = vector.broadcast %52 : vector<1x128xf32> to vector<16x128xf32>
    %54 = arith.addf %51, %53 : vector<16x128xf32>
    %55 = arith.truncf %54 : vector<16x128xf32> to vector<16x128xbf16>
    %c0_17 = arith.constant 0 : index
    %c0_18 = arith.constant 0 : index
    %56 = vector.load %arg7[%c0_17, %c0_18] : memref<16x128xbf16, #tpu.memory_space<vmem>>, vector<16x128xbf16>
    tpu.vector_store %arg7[%c0_17, %c0_18], %55 {strides = array<i32>} : memref<16x128xbf16, #tpu.memory_space<vmem>>, vector<16x128xbf16>,
    %c16_i32 = arith.constant 16 : i32
    %57 = arith.muli %arg0, %c16_i32 : i32
    %58 = tpu.iota {dimensions = array<i32: 0>} : vector<16x1xi32>
    %59 = vector.broadcast %57 : i32 to vector<16x1xi32>
    %60 = arith.addi %59, %58 : vector<16x1xi32>
    %c32_i32 = arith.constant 32 : i32
    %61 = vector.broadcast %c32_i32 : i32 to vector<16x1xi32>
    %62 = arith.cmpi slt, %60, %61 : vector<16x1xi32>
    %cst_19 = arith.constant 0.000000e+00 : f32
    %63 = vector.shape_cast %62 : vector<16x1xi1> to vector<16x1xi1>
    %64 = vector.broadcast %63 : vector<16x1xi1> to vector<16x128xi1>
    %65 = vector.broadcast %cst_19 : f32 to vector<16x128xf32>
    %66 = arith.select %64, %54, %65 : vector<16x128xi1>, vector<16x128xf32>
    %cst_20 = arith.constant dense<0.000000e+00> : vector<128xf32>
    %67 = vector.multi_reduction <add>, %66, %cst_20 [0] : vector<16x128xf32> to vector<128xf32>
    %68 = vector.shape_cast %67 : vector<128xf32> to vector<1x128xf32>
    %c0_21 = arith.constant 0 : index
    %c0_22 = arith.constant 0 : index
    %c0_23 = arith.constant 0 : index
    %69 = vector.load %arg8[%c0_21, %c0_22, %c0_23] : memref<1x2x128xf32, #tpu.memory_space<vmem>>, vector<1x1x128xf32>
    %70 = vector.shape_cast %69 : vector<1x1x128xf32> to vector<1x128xf32>
    %71 = vector.shape_cast %68 : vector<1x128xf32> to vector<1x1x128xf32>
    tpu.vector_store %arg8[%c0_21, %c0_22, %c0_23], %71 {strides = array<i32>} : memref<1x2x128xf32, #tpu.memory_space<vmem>>, vector<1x1x128xf32>,
    %72 = arith.mulf %66, %66 : vector<16x128xf32>
    %cst_24 = arith.constant dense<0.000000e+00> : vector<128xf32>
    %73 = vector.multi_reduction <add>, %72, %cst_24 [0] : vector<16x128xf32> to vector<128xf32>
    %74 = vector.shape_cast %73 : vector<128xf32> to vector<1x128xf32>
    %c0_25 = arith.constant 0 : index
    %c1 = arith.constant 1 : index
    %c0_26 = arith.constant 0 : index
    %75 = vector.load %arg8[%c0_25, %c1, %c0_26] : memref<1x2x128xf32, #tpu.memory_space<vmem>>, vector<1x1x128xf32>
    %76 = vector.shape_cast %75 : vector<1x1x128xf32> to vector<1x128xf32>
    %77 = vector.shape_cast %74 : vector<1x128xf32> to vector<1x1x128xf32>
    tpu.vector_store %arg8[%c0_25, %c1, %c0_26], %77 {strides = array<i32>} : memref<1x2x128xf32, #tpu.memory_space<vmem>>, vector<1x1x128xf32>,
    return
  }
  func.func @transform_0(%arg0: i32) -> (i32, i32) {
    %c0_i32 = arith.constant 0 : i32
    %c0_i32_0 = arith.constant 0 : i32
    return %arg0, %c0_i32 : i32, i32
  }
  func.func @transform_1(%arg0: i32) -> (i32, i32) {
    %c0_i32 = arith.constant 0 : i32
    %c0_i32_0 = arith.constant 0 : i32
    return %arg0, %c0_i32 : i32, i32
  }
  func.func @transform_2(%arg0: i32) -> (i32, i32) {
    %c0_i32 = arith.constant 0 : i32
    %c0_i32_0 = arith.constant 0 : i32
    return %arg0, %c0_i32 : i32, i32
  }
  func.func @transform_3(%arg0: i32) -> (i32, i32) {
    %c0_i32 = arith.constant 0 : i32
    %c0_i32_0 = arith.constant 0 : i32
    %c0_i32_1 = arith.constant 0 : i32
    return %c0_i32, %c0_i32_0 : i32, i32
  }
  func.func @transform_4(%arg0: i32) -> (i32, i32) {
    %c0_i32 = arith.constant 0 : i32
    %c0_i32_0 = arith.constant 0 : i32
    %c0_i32_1 = arith.constant 0 : i32
    return %c0_i32, %c0_i32_0 : i32, i32
  }
  func.func @transform_5(%arg0: i32) -> (i32, i32) {
    %c0_i32 = arith.constant 0 : i32
    %c0_i32_0 = arith.constant 0 : i32
    %c0_i32_1 = arith.constant 0 : i32
    return %c0_i32, %c0_i32_0 : i32, i32
  }
  func.func @transform_6(%arg0: i32) -> (i32, i32) {
    %c0_i32 = arith.constant 0 : i32
    %c0_i32_0 = arith.constant 0 : i32
    return %arg0, %c0_i32 : i32, i32
  }
  func.func @transform_7(%arg0: i32) -> (i32, i32, i32) {
    %c0_i32 = arith.constant 0 : i32
    %c0_i32_0 = arith.constant 0 : i32
    %c0_i32_1 = arith.constant 0 : i32
    return %arg0, %c0_i32, %c0_i32_0 : i32, i32, i32
  }
}

</mosaic_0001>

<llo_original>
// kernel: tpu_custom_call.1
$region0: #{tpu_custom_call.1}
  #allocation0 [shape = 'u32[]', space=smem, size = 0x4, offset = 0x4, fixed_abs, tag = 'smem constant byte address 0x4 - core index']
  #allocation1 [shape = 'u32[144,128]{1,0:T(1,128)}', space=vmem, size = 0x12000, scoped, tag = 'internal scratch']
  %s0 = inlined_call_operand.vmem [shape: f32[256,3], index: 0, kind: input, shape index: {}]
  %s1 = inlined_call_operand.vmem [shape: bf16[256,16], index: 1, kind: input, shape index: {}]
  %s2 = inlined_call_operand.vmem [shape: f32[32,1], index: 2, kind: input, shape index: {}]
  %s3 = inlined_call_operand.vmem [shape: f32[4,256], index: 3, kind: input, shape index: {}]
  %s4 = inlined_call_operand.vmem [shape: bf16[256,128], index: 4, kind: input, shape index: {}]
  %s5 = inlined_call_operand.vmem [shape: f32[1,128], index: 5, kind: input, shape index: {}]
  %s6 = inlined_call_operand.hbm [shape: bf16[32,128], index: 6, kind: output, shape index: {0}]
  %s7 = inlined_call_operand.hbm [shape: f32[2,2,128], index: 7, kind: output, shape index: {1}]
  %8 = xla_tuple %s6, %s7
  %s9 = sld [smem:[#allocation0]]
  $region65: #{tpu_custom_call.1} parent=0
    _
  %s11 = ssub.s32 1, %s9
  %s12 = scalar_select 0, %s11, %s9
  $region1: #{tpu_custom_call.1} parent=0
    #allocation2 [shape = 'u8[8192]{0}', space=vmem, size = 0x2000, scoped, tag = 'output window, operand 0']
    #allocation3 [shape = 's32[2]{0}', space=sflag, size = 0x8, scoped, tag = 'scoped memory for tpu_custom_call.1']
    #allocation4 [shape = 'u8[2048]{0}', space=vmem, size = 0x800, scoped, tag = 'output window, operand 1']
    #allocation5 [shape = 's32[2]{0}', space=sflag, size = 0x8, scoped, tag = 'scoped memory for tpu_custom_call.1']
    %13 = vsyncpa [#allocation3], 0
    %s14 = scalar_lea.sflag [#allocation3], 1
    %15 = vsyncpa %s14, 0
    %16 = vsyncpa [#allocation5], 0
    %s17 = scalar_lea.sflag [#allocation5], 1
    %18 = vsyncpa %s17, 0
    loop: start=0, step=1, limit=4
    $region2: #{tpu_custom_call.1} parent=1 // loop_pre_header
      _
    $region3: #{tpu_custom_call.1} parent=1 // loop_header
      %s20 = sphi 0, %s24
      %p21 = scmp.ge.s32.totalorder %s20, 4
      %s30 = sphi 0, %s32
      %s33 = sphi 0, %s30
      %s34 = sphi 0, %s33
      %s50 = sphi 0, %s34
      %s56 = sphi 0, %s58
      %s59 = sphi 0, %s56
      %s60 = sphi 0, %s59
      %s76 = sphi 0, %s60
      %s82 = sphi 0, %s84
      %s85 = sphi 0, %s82
      %s86 = sphi 0, %s85
      %s102 = sphi 0, %s86
      %s106 = sphi 0, %s106
      %s108 = sphi 0, %s106
      %s109 = sphi 0, %s108
      %s123 = sphi 0, %s109
      %s127 = sphi 0, %s127
      %s129 = sphi 0, %s127
      %s130 = sphi 0, %s129
      %s144 = sphi 0, %s130
      %s148 = sphi 0, %s148
      %s150 = sphi 0, %s148
      %s151 = sphi 0, %s150
      %s165 = sphi 0, %s151
      %s171 = sphi 0, %s173
      %s174 = sphi 0, %s171
      %s175 = sphi 0, %s174
      %s191 = sphi 0, %s175
      %s197 = sphi 0, %s199
      %s200 = sphi 0, %s197
      %s201 = sphi 0, %s200
      %s217 = sphi 0, %s201
    $region4: #{tpu_custom_call.1} parent=1 // loop_header_branch
      %23 = sbr.rel (%p21) target = $region8
    $region5: #{tpu_custom_call.1} parent=1 // loop_body
      %s25 = ssub.s32 %s20, 1
      %s26 = ssub.s32 %s20, 2
      %s27 = sadd.s32 %s20, 1
      %s28 = ssub.s32 %s20, %s27
      %p29 = scmp.eq.s32.totalorder %s28, 0
      %s31 = sadd.s32 %s30, 1
      %s32 = scalar_select %p29, %s30, %s31
      %p35 = pneg %p29
      %p36 = scmp.eq.s32.totalorder %s20, 1
      %p37 = por %p35, %p36
      %p38 = scmp.ne.s32.totalorder %s30, %s33
      %p39 = scmp.eq.s32.totalorder %s20, 0
      %p40 = por %p38, %p39
      %p41 = scmp.ne.s32.totalorder %s30, %s33
      %p42 = scmp.eq.s32.totalorder %s25, 1
      %p43 = por %p41, %p42
      %p44 = scmp.ne.s32.totalorder %s33, %s34
      %p45 = scmp.eq.s32.totalorder %s25, 0
      %p46 = por %p44, %p45
      %p47 = scmp.ne.s32.totalorder %s33, %s34
      %p48 = scmp.eq.s32.totalorder %s26, 1
      %p49 = por %p47, %p48
      %p51 = scmp.ne.s32.totalorder %s34, %s50
      %p52 = scmp.eq.s32.totalorder %s26, 0
      %p53 = por %p51, %p52
      %s54 = ssub.s32 %s20, %s27
      %p55 = scmp.eq.s32.totalorder %s54, 0
      %s57 = sadd.s32 %s56, 1
      %s58 = scalar_select %p55, %s56, %s57
      %p61 = pneg %p55
      %p62 = scmp.eq.s32.totalorder %s20, 1
      %p63 = por %p61, %p62
      %p64 = scmp.ne.s32.totalorder %s56, %s59
      %p65 = scmp.eq.s32.totalorder %s20, 0
      %p66 = por %p64, %p65
      %p67 = scmp.ne.s32.totalorder %s56, %s59
      %p68 = scmp.eq.s32.totalorder %s25, 1
      %p69 = por %p67, %p68
      %p70 = scmp.ne.s32.totalorder %s59, %s60
      %p71 = scmp.eq.s32.totalorder %s25, 0
      %p72 = por %p70, %p71
      %p73 = scmp.ne.s32.totalorder %s59, %s60
      %p74 = scmp.eq.s32.totalorder %s26, 1
      %p75 = por %p73, %p74
      %p77 = scmp.ne.s32.totalorder %s60, %s76
      %p78 = scmp.eq.s32.totalorder %s26, 0
      %p79 = por %p77, %p78
      %s80 = ssub.s32 %s20, %s27
      %p81 = scmp.eq.s32.totalorder %s80, 0
      %s83 = sadd.s32 %s82, 1
      %s84 = scalar_select %p81, %s82, %s83
      %p87 = pneg %p81
      %p88 = scmp.eq.s32.totalorder %s20, 1
      %p89 = por %p87, %p88
      %p90 = scmp.ne.s32.totalorder %s82, %s85
      %p91 = scmp.eq.s32.totalorder %s20, 0
      %p92 = por %p90, %p91
      %p93 = scmp.ne.s32.totalorder %s82, %s85
      %p94 = scmp.eq.s32.totalorder %s25, 1
      %p95 = por %p93, %p94
      %p96 = scmp.ne.s32.totalorder %s85, %s86
      %p97 = scmp.eq.s32.totalorder %s25, 0
      %p98 = por %p96, %p97
      %p99 = scmp.ne.s32.totalorder %s85, %s86
      %p100 = scmp.eq.s32.totalorder %s26, 1
      %p101 = por %p99, %p100
      %p103 = scmp.ne.s32.totalorder %s86, %s102
      %p104 = scmp.eq.s32.totalorder %s26, 0
      %p105 = por %p103, %p104
      %s107 = sadd.s32 %s106, 1
      %p110 = scmp.eq.s32.totalorder %s20, 1
      %p111 = scmp.ne.s32.totalorder %s106, %s108
      %p112 = scmp.eq.s32.totalorder %s20, 0
      %p113 = por %p111, %p112
      %p114 = scmp.ne.s32.totalorder %s106, %s108
      %p115 = scmp.eq.s32.totalorder %s25, 1
      %p116 = por %p114, %p115
      %p117 = scmp.ne.s32.totalorder %s108, %s109
      %p118 = scmp.eq.s32.totalorder %s25, 0
      %p119 = por %p117, %p118
      %p120 = scmp.ne.s32.totalorder %s108, %s109
      %p121 = scmp.eq.s32.totalorder %s26, 1
      %p122 = por %p120, %p121
      %p124 = scmp.ne.s32.totalorder %s109, %s123
      %p125 = scmp.eq.s32.totalorder %s26, 0
      %p126 = por %p124, %p125
      %s128 = sadd.s32 %s127, 1
      %p131 = scmp.eq.s32.totalorder %s20, 1
      %p132 = scmp.ne.s32.totalorder %s127, %s129
      %p133 = scmp.eq.s32.totalorder %s20, 0
      %p134 = por %p132, %p133
      %p135 = scmp.ne.s32.totalorder %s127, %s129
      %p136 = scmp.eq.s32.totalorder %s25, 1
      %p137 = por %p135, %p136
      %p138 = scmp.ne.s32.totalorder %s129, %s130
      %p139 = scmp.eq.s32.totalorder %s25, 0
      %p140 = por %p138, %p139
      %p141 = scmp.ne.s32.totalorder %s129, %s130
      %p142 = scmp.eq.s32.totalorder %s26, 1
      %p143 = por %p141, %p142
      %p145 = scmp.ne.s32.totalorder %s130, %s144
      %p146 = scmp.eq.s32.totalorder %s26, 0
      %p147 = por %p145, %p146
      %s149 = sadd.s32 %s148, 1
      %p152 = scmp.eq.s32.totalorder %s20, 1
      %p153 = scmp.ne.s32.totalorder %s148, %s150
      %p154 = scmp.eq.s32.totalorder %s20, 0
      %p155 = por %p153, %p154
      %p156 = scmp.ne.s32.totalorder %s148, %s150
      %p157 = scmp.eq.s32.totalorder %s25, 1
      %p158 = por %p156, %p157
      %p159 = scmp.ne.s32.totalorder %s150, %s151
      %p160 = scmp.eq.s32.totalorder %s25, 0
      %p161 = por %p159, %p160
      %p162 = scmp.ne.s32.totalorder %s150, %s151
      %p163 = scmp.eq.s32.totalorder %s26, 1
      %p164 = por %p162, %p163
      %p166 = scmp.ne.s32.totalorder %s151, %s165
      %p167 = scmp.eq.s32.totalorder %s26, 0
      %p168 = por %p166, %p167
      %s169 = ssub.s32 %s20, %s27
      %p170 = scmp.eq.s32.totalorder %s169, 0
      %s172 = sadd.s32 %s171, 1
      %s173 = scalar_select %p170, %s171, %s172
      %p176 = pneg %p170
      %p177 = scmp.eq.s32.totalorder %s20, 1
      %p178 = por %p176, %p177
      %p179 = scmp.ne.s32.totalorder %s171, %s174
      %p180 = scmp.eq.s32.totalorder %s20, 0
      %p181 = por %p179, %p180
      %p182 = scmp.ne.s32.totalorder %s171, %s174
      %p183 = scmp.eq.s32.totalorder %s25, 1
      %p184 = por %p182, %p183
      %p185 = scmp.ne.s32.totalorder %s174, %s175
      %p186 = scmp.eq.s32.totalorder %s25, 0
      %p187 = por %p185, %p186
      %p188 = scmp.ne.s32.totalorder %s174, %s175
      %p189 = scmp.eq.s32.totalorder %s26, 1
      %p190 = por %p188, %p189
      %p192 = scmp.ne.s32.totalorder %s175, %s191
      %p193 = scmp.eq.s32.totalorder %s26, 0
      %p194 = por %p192, %p193
      %s195 = ssub.s32 %s20, %s27
      %p196 = scmp.eq.s32.totalorder %s195, 0
      %s198 = sadd.s32 %s197, 1
      %s199 = scalar_select %p196, %s197, %s198
      %p202 = pneg %p196
      %p203 = scmp.eq.s32.totalorder %s20, 1
      %p204 = por %p202, %p203
      %p205 = scmp.ne.s32.totalorder %s197, %s200
      %p206 = scmp.eq.s32.totalorder %s20, 0
      %p207 = por %p205, %p206
      %p208 = scmp.ne.s32.totalorder %s197, %s200
      %p209 = scmp.eq.s32.totalorder %s25, 1
      %p210 = por %p208, %p209
      %p211 = scmp.ne.s32.totalorder %s200, %s201
      %p212 = scmp.eq.s32.totalorder %s25, 0
      %p213 = por %p211, %p212
      %p214 = scmp.ne.s32.totalorder %s200, %s201
      %p215 = scmp.eq.s32.totalorder %s26, 1
      %p216 = por %p214, %p215
      %p218 = scmp.ne.s32.totalorder %s201, %s217
      %p219 = scmp.eq.s32.totalorder %s26, 0
      %p220 = por %p218, %p219
      %p221 = scmp.le.s32.totalorder 1, %s20
      %p222 = scmp.lt.s32.totalorder %s20, 3
      %p223 = pnand %p221, %p222
      %p224 = pneg %p223
      // Predicated region
      $region9: #{tpu_custom_call.1} parent=5 // pred_check
        _
      $region10: #{tpu_custom_call.1} parent=5 // pred_check_branch
        %226 = sbr.rel (%p223) target = $region12
      $region11: #{tpu_custom_call.1} parent=5 // pred_region
        %s227 = ssub.s32 %s20, 1
        // Predicated region
        $region13: #{tpu_custom_call.1} parent=11 // pred_check
          %p228 = pneg %p119
        $region14: #{tpu_custom_call.1} parent=11 // pred_check_branch
          %230 = sbr.rel (%p228) target = $region16
        $region15: #{tpu_custom_call.1} parent=11 // pred_region
          _
        $region16: #{tpu_custom_call.1} parent=11 // pred_fallthru
          _
        // Predicated region
        $region17: #{tpu_custom_call.1} parent=11 // pred_check
          %p231 = pneg %p140
        $region18: #{tpu_custom_call.1} parent=11 // pred_check_branch
          %233 = sbr.rel (%p231) target = $region20
        $region19: #{tpu_custom_call.1} parent=11 // pred_region
          _
        $region20: #{tpu_custom_call.1} parent=11 // pred_fallthru
          _
        // Predicated region
        $region21: #{tpu_custom_call.1} parent=11 // pred_check
          %p234 = pneg %p161
        $region22: #{tpu_custom_call.1} parent=11 // pred_check_branch
          %236 = sbr.rel (%p234) target = $region24
        $region23: #{tpu_custom_call.1} parent=11 // pred_region
          _
        $region24: #{tpu_custom_call.1} parent=11 // pred_fallthru
          _
      $region12: #{tpu_custom_call.1} parent=5 // pred_fallthru
        _
      %p237 = scmp.lt.s32.totalorder %s20, 2
      // Predicated region
      $region25: #{tpu_custom_call.1} parent=5 // pred_check
        %p238 = pneg %p237
      $region26: #{tpu_custom_call.1} parent=5 // pred_check_branch
        %240 = sbr.rel (%p238) target = $region28
      $region27: #{tpu_custom_call.1} parent=5 // pred_region
        // Predicated region
        $region29: #{tpu_custom_call.1} parent=27 // pred_check
          %p241 = pneg %p40
        $region30: #{tpu_custom_call.1} parent=27 // pred_check_branch
          %243 = sbr.rel (%p241) target = $region32
        $region31: #{tpu_custom_call.1} parent=27 // pred_region
          %s244 = smul.u32 16, %s20
          %p245 = scmp.lt.s32.totalorder %s244, 31
          %s246 = scalar_select %p245, %s244, 31
          %s247 = smul.addr %s246, 8
          %s248 = scalar_lea.vmem %s0, %s247
          %s249 = smul.u32 16, %s20
        $region32: #{tpu_custom_call.1} parent=27 // pred_fallthru
          _
        // Predicated region
        $region33: #{tpu_custom_call.1} parent=27 // pred_check
          %p250 = pneg %p66
        $region34: #{tpu_custom_call.1} parent=27 // pred_check_branch
          %252 = sbr.rel (%p250) target = $region36
        $region35: #{tpu_custom_call.1} parent=27 // pred_region
          %s253 = smul.u32 16, %s20
          %p254 = scmp.lt.s32.totalorder %s253, 31
          %s255 = scalar_select %p254, %s253, 31
          %s256 = smul.addr %s255, 4
          %s257 = scalar_lea.vmem %s1, %s256
          %s258 = smul.u32 16, %s20
        $region36: #{tpu_custom_call.1} parent=27 // pred_fallthru
          _
        // Predicated region
        $region37: #{tpu_custom_call.1} parent=27 // pred_check
          %p259 = pneg %p92
        $region38: #{tpu_custom_call.1} parent=27 // pred_check_branch
          %261 = sbr.rel (%p259) target = $region40
        $region39: #{tpu_custom_call.1} parent=27 // pred_region
          %s262 = smul.u32 2, %s20
          %p263 = scmp.lt.s32.totalorder %s262, 3
          %s264 = scalar_select %p263, %s262, 3
          %s265 = smul.addr %s264, 8
          %s266 = scalar_lea.vmem %s2, %s265
          %s267 = smul.u32 2, %s20
        $region40: #{tpu_custom_call.1} parent=27 // pred_fallthru
          _
      $region28: #{tpu_custom_call.1} parent=5 // pred_fallthru
        _
      %p268 = scmp.le.s32.totalorder 1, %s20
      %p269 = scmp.lt.s32.totalorder %s20, 3
      %p270 = pnand %p268, %p269
      %p271 = pneg %p270
      // Predicated region
      $region41: #{tpu_custom_call.1} parent=5 // pred_check
        _
      $region42: #{tpu_custom_call.1} parent=5 // pred_check_branch
        %273 = sbr.rel (%p270) target = $region44
      $region43: #{tpu_custom_call.1} parent=5 // pred_region
        %s274 = ssub.s32 %s20, 1
        %s275 = smul.u32 16, %s25
        %p276 = scmp.lt.s32.totalorder %s275, 31
        %s277 = scalar_select %p276, %s275, 31
        %s278 = smul.addr %s277, 8
        %s279 = scalar_lea.vmem %s0, %s278
        %p280 = pneg %p46
        %p281 = pneg %p43
        %s282 = smul.u32 16, %s25
        %p283 = scmp.lt.s32.totalorder %s282, 31
        %s284 = scalar_select %p283, %s282, 31
        %s285 = smul.addr %s284, 4
        %s286 = scalar_lea.vmem %s1, %s285
        %p287 = pneg %p72
        %p288 = pneg %p69
        %s289 = smul.u32 2, %s25
        %p290 = scmp.lt.s32.totalorder %s289, 3
        %s291 = scalar_select %p290, %s289, 3
        %s292 = smul.addr %s291, 8
        %s293 = scalar_lea.vmem %s2, %s292
        %p294 = pneg %p98
        %p295 = pneg %p95
        %p296 = pneg %p119
        %p297 = pneg %p116
        %p298 = pneg %p140
        %p299 = pneg %p137
        %p300 = pneg %p161
        %p301 = pneg %p158
        %p302 = pneg %p187
        %p303 = pneg %p184
        %s304 = sand.u32 %s174, 1
        %s305 = scalar_lea.sflag [#allocation3], %s304
        %s306 = sand.u32 %s174, 1
        %s307 = smul.addr %s306, 8
        %s308 = scalar_lea.vmem [#allocation2], %s307
        %p309 = pneg %p213
        %p310 = pneg %p210
        %s311 = sand.u32 %s200, 1
        %s312 = scalar_lea.sflag [#allocation5], %s311
        %s313 = sand.u32 %s200, 1
        %s314 = smul.addr %s313, 2
        %s315 = scalar_lea.vmem [#allocation4], %s314
        %s316 = smul.u32 16, %s25
        %p317 = scmp.lt.s32.totalorder %s316, 31
        %s318 = scalar_select %p317, %s316, 31
        %s319 = smul.addr %s318, 8
        %s320 = scalar_lea.vmem %s0, %s319
        %s321 = smul.u32 16, %s25
        %s322 = smul.u32 16, %s25
        %p323 = scmp.lt.s32.totalorder %s322, 31
        %s324 = scalar_select %p323, %s322, 31
        %s325 = smul.addr %s324, 4
        %s326 = scalar_lea.vmem %s1, %s325
        %s327 = smul.u32 16, %s25
        %s328 = smul.u32 2, %s25
        %p329 = scmp.lt.s32.totalorder %s328, 3
        %s330 = scalar_select %p329, %s328, 3
        %s331 = smul.addr %s330, 8
        %s332 = scalar_lea.vmem %s2, %s331
        %s333 = smul.u32 2, %s25
        %s334 = smul.u32 2, %s25
        %v336 = vld [vmem:[%s320] sm:$0xff]
        %v337 = vld [vmem:[%s320 + $0x8] sm:$0xff]
        %v338 = vld [vmem:[%s320 + $0x10] sm:$0xff]
        %v339 = vld [vmem:[%s320 + $0x18] sm:$0xff]
        %v340 = vld [vmem:[%s320 + $0x20] sm:$0xff]
        %v341 = vld [vmem:[%s320 + $0x28] sm:$0xff]
        %v342 = vld [vmem:[%s320 + $0x30] sm:$0xff]
        %v343 = vld [vmem:[%s320 + $0x38] sm:$0xff]
        %v344 = vld [vmem:[%s320 + $0x40] sm:$0xff]
        %v345 = vld [vmem:[%s320 + $0x48] sm:$0xff]
        %v346 = vld [vmem:[%s320 + $0x50] sm:$0xff]
        %v347 = vld [vmem:[%s320 + $0x58] sm:$0xff]
        %v348 = vld [vmem:[%s320 + $0x60] sm:$0xff]
        %v349 = vld [vmem:[%s320 + $0x68] sm:$0xff]
        %v350 = vld [vmem:[%s320 + $0x70] sm:$0xff]
        %v351 = vld [vmem:[%s320 + $0x78] sm:$0xff]
        %v352 = vld [vmem:[%s3] sm:$0xff]
        %354 = vset.pattern.permute.xlu0 0
        %355 = vperm.xlu0 %354, %v336
        %v356 = vpop.permute.xlu0 %355
        %359 = vset.pattern.permute.xlu0 0
        %360 = vperm.xlu0 %359, %v337
        %v361 = vpop.permute.xlu0 %360
        %364 = vset.pattern.permute.xlu0 0
        %365 = vperm.xlu0 %364, %v338
        %v366 = vpop.permute.xlu0 %365
        %369 = vset.pattern.permute.xlu0 0
        %370 = vperm.xlu0 %369, %v339
        %v371 = vpop.permute.xlu0 %370
        %374 = vset.pattern.permute.xlu0 0
        %375 = vperm.xlu0 %374, %v340
        %v376 = vpop.permute.xlu0 %375
        %379 = vset.pattern.permute.xlu0 0
        %380 = vperm.xlu0 %379, %v341
        %v381 = vpop.permute.xlu0 %380
        %384 = vset.pattern.permute.xlu0 0
        %385 = vperm.xlu0 %384, %v342
        %v386 = vpop.permute.xlu0 %385
        %389 = vset.pattern.permute.xlu0 0
        %390 = vperm.xlu0 %389, %v343
        %v391 = vpop.permute.xlu0 %390
        %394 = vset.pattern.permute.xlu0 0
        %395 = vperm.xlu0 %394, %v344
        %v396 = vpop.permute.xlu0 %395
        %399 = vset.pattern.permute.xlu0 0
        %400 = vperm.xlu0 %399, %v345
        %v401 = vpop.permute.xlu0 %400
        %404 = vset.pattern.permute.xlu0 0
        %405 = vperm.xlu0 %404, %v346
        %v406 = vpop.permute.xlu0 %405
        %409 = vset.pattern.permute.xlu0 0
        %410 = vperm.xlu0 %409, %v347
        %v411 = vpop.permute.xlu0 %410
        %414 = vset.pattern.permute.xlu0 0
        %415 = vperm.xlu0 %414, %v348
        %v416 = vpop.permute.xlu0 %415
        %419 = vset.pattern.permute.xlu0 0
        %420 = vperm.xlu0 %419, %v349
        %v421 = vpop.permute.xlu0 %420
        %424 = vset.pattern.permute.xlu0 0
        %425 = vperm.xlu0 %424, %v350
        %v426 = vpop.permute.xlu0 %425
        %429 = vset.pattern.permute.xlu0 0
        %430 = vperm.xlu0 %429, %v351
        %v431 = vpop.permute.xlu0 %430
        %v434 = vlaneseq
        %v435 = vshrl.u32 %v434, 7
        %v436 = vsub.s32 0, %v435
        %v437 = vrot.slane %v352, %v436
        %v438 = vlaneseq
        %v439 = vshrl.u32 %v438, 7
        %v440 = vsub.s32 4, %v439
        %v441 = vrot.slane %v352, %v440
        %v444 = vlaneseq
        %v445 = vshrl.u32 %v444, 7
        %v446 = vsub.s32 0, %v445
        %v447 = vrot.slane %v437, %v446
        %v448 = vlaneseq
        %v449 = vshrl.u32 %v448, 7
        %v450 = vsub.s32 0, %v449
        %v451 = vrot.slane %v441, %v450
        %v452 = vmul.f32 %v356, %v447
        %v453 = vmul.f32 %v356, %v451
        %v454 = vmul.f32 %v361, %v447
        %v455 = vmul.f32 %v361, %v451
        %v456 = vmul.f32 %v366, %v447
        %v457 = vmul.f32 %v366, %v451
        %v458 = vmul.f32 %v371, %v447
        %v459 = vmul.f32 %v371, %v451
        %v460 = vmul.f32 %v376, %v447
        %v461 = vmul.f32 %v376, %v451
        %v462 = vmul.f32 %v381, %v447
        %v463 = vmul.f32 %v381, %v451
        %v464 = vmul.f32 %v386, %v447
        %v465 = vmul.f32 %v386, %v451
        %v466 = vmul.f32 %v391, %v447
        %v467 = vmul.f32 %v391, %v451
        %v468 = vmul.f32 %v396, %v447
        %v469 = vmul.f32 %v396, %v451
        %v470 = vmul.f32 %v401, %v447
        %v471 = vmul.f32 %v401, %v451
        %v472 = vmul.f32 %v406, %v447
        %v473 = vmul.f32 %v406, %v451
        %v474 = vmul.f32 %v411, %v447
        %v475 = vmul.f32 %v411, %v451
        %v476 = vmul.f32 %v416, %v447
        %v477 = vmul.f32 %v416, %v451
        %v478 = vmul.f32 %v421, %v447
        %v479 = vmul.f32 %v421, %v451
        %v480 = vmul.f32 %v426, %v447
        %v481 = vmul.f32 %v426, %v451
        %v482 = vmul.f32 %v431, %v447
        %v483 = vmul.f32 %v431, %v451
        %484 = vset.pattern.permute.xlu0 1
        %485 = vperm.xlu0 %484, %v336
        %v486 = vpop.permute.xlu0 %485
        %488 = vset.pattern.permute.xlu0 1
        %489 = vperm.xlu0 %488, %v337
        %v490 = vpop.permute.xlu0 %489
        %492 = vset.pattern.permute.xlu0 1
        %493 = vperm.xlu0 %492, %v338
        %v494 = vpop.permute.xlu0 %493
        %496 = vset.pattern.permute.xlu0 1
        %497 = vperm.xlu0 %496, %v339
        %v498 = vpop.permute.xlu0 %497
        %500 = vset.pattern.permute.xlu0 1
        %501 = vperm.xlu0 %500, %v340
        %v502 = vpop.permute.xlu0 %501
        %504 = vset.pattern.permute.xlu0 1
        %505 = vperm.xlu0 %504, %v341
        %v506 = vpop.permute.xlu0 %505
        %508 = vset.pattern.permute.xlu0 1
        %509 = vperm.xlu0 %508, %v342
        %v510 = vpop.permute.xlu0 %509
        %512 = vset.pattern.permute.xlu0 1
        %513 = vperm.xlu0 %512, %v343
        %v514 = vpop.permute.xlu0 %513
        %516 = vset.pattern.permute.xlu0 1
        %517 = vperm.xlu0 %516, %v344
        %v518 = vpop.permute.xlu0 %517
        %520 = vset.pattern.permute.xlu0 1
        %521 = vperm.xlu0 %520, %v345
        %v522 = vpop.permute.xlu0 %521
        %524 = vset.pattern.permute.xlu0 1
        %525 = vperm.xlu0 %524, %v346
        %v526 = vpop.permute.xlu0 %525
        %528 = vset.pattern.permute.xlu0 1
        %529 = vperm.xlu0 %528, %v347
        %v530 = vpop.permute.xlu0 %529
        %532 = vset.pattern.permute.xlu0 1
        %533 = vperm.xlu0 %532, %v348
        %v534 = vpop.permute.xlu0 %533
        %536 = vset.pattern.permute.xlu0 1
        %537 = vperm.xlu0 %536, %v349
        %v538 = vpop.permute.xlu0 %537
        %540 = vset.pattern.permute.xlu0 1
        %541 = vperm.xlu0 %540, %v350
        %v542 = vpop.permute.xlu0 %541
        %544 = vset.pattern.permute.xlu0 1
        %545 = vperm.xlu0 %544, %v351
        %v546 = vpop.permute.xlu0 %545
        %v548 = vlaneseq
        %v549 = vshrl.u32 %v548, 7
        %v550 = vsub.s32 1, %v549
        %v551 = vrot.slane %v352, %v550
        %v552 = vlaneseq
        %v553 = vshrl.u32 %v552, 7
        %v554 = vsub.s32 5, %v553
        %v555 = vrot.slane %v352, %v554
        %v558 = vlaneseq
        %v559 = vshrl.u32 %v558, 7
        %v560 = vsub.s32 1, %v559
        %v561 = vrot.slane %v551, %v560
        %v562 = vlaneseq
        %v563 = vshrl.u32 %v562, 7
        %v564 = vsub.s32 1, %v563
        %v565 = vrot.slane %v555, %v564
        %v566 = vmul.f32 %v486, %v561
        %v567 = vmul.f32 %v486, %v565
        %v568 = vmul.f32 %v490, %v561
        %v569 = vmul.f32 %v490, %v565
        %v570 = vmul.f32 %v494, %v561
        %v571 = vmul.f32 %v494, %v565
        %v572 = vmul.f32 %v498, %v561
        %v573 = vmul.f32 %v498, %v565
        %v574 = vmul.f32 %v502, %v561
        %v575 = vmul.f32 %v502, %v565
        %v576 = vmul.f32 %v506, %v561
        %v577 = vmul.f32 %v506, %v565
        %v578 = vmul.f32 %v510, %v561
        %v579 = vmul.f32 %v510, %v565
        %v580 = vmul.f32 %v514, %v561
        %v581 = vmul.f32 %v514, %v565
        %v582 = vmul.f32 %v518, %v561
        %v583 = vmul.f32 %v518, %v565
        %v584 = vmul.f32 %v522, %v561
        %v585 = vmul.f32 %v522, %v565
        %v586 = vmul.f32 %v526, %v561
        %v587 = vmul.f32 %v526, %v565
        %v588 = vmul.f32 %v530, %v561
        %v589 = vmul.f32 %v530, %v565
        %v590 = vmul.f32 %v534, %v561
        %v591 = vmul.f32 %v534, %v565
        %v592 = vmul.f32 %v538, %v561
        %v593 = vmul.f32 %v538, %v565
        %v594 = vmul.f32 %v542, %v561
        %v595 = vmul.f32 %v542, %v565
        %v596 = vmul.f32 %v546, %v561
        %v597 = vmul.f32 %v546, %v565
        %v598 = vadd.f32 %v452, %v566
        %v599 = vadd.f32 %v453, %v567
        %v600 = vadd.f32 %v454, %v568
        %v601 = vadd.f32 %v455, %v569
        %v602 = vadd.f32 %v456, %v570
        %v603 = vadd.f32 %v457, %v571
        %v604 = vadd.f32 %v458, %v572
        %v605 = vadd.f32 %v459, %v573
        %v606 = vadd.f32 %v460, %v574
        %v607 = vadd.f32 %v461, %v575
        %v608 = vadd.f32 %v462, %v576
        %v609 = vadd.f32 %v463, %v577
        %v610 = vadd.f32 %v464, %v578
        %v611 = vadd.f32 %v465, %v579
        %v612 = vadd.f32 %v466, %v580
        %v613 = vadd.f32 %v467, %v581
        %v614 = vadd.f32 %v468, %v582
        %v615 = vadd.f32 %v469, %v583
        %v616 = vadd.f32 %v470, %v584
        %v617 = vadd.f32 %v471, %v585
        %v618 = vadd.f32 %v472, %v586
        %v619 = vadd.f32 %v473, %v587
        %v620 = vadd.f32 %v474, %v588
        %v621 = vadd.f32 %v475, %v589
        %v622 = vadd.f32 %v476, %v590
        %v623 = vadd.f32 %v477, %v591
        %v624 = vadd.f32 %v478, %v592
        %v625 = vadd.f32 %v479, %v593
        %v626 = vadd.f32 %v480, %v594
        %v627 = vadd.f32 %v481, %v595
        %v628 = vadd.f32 %v482, %v596
        %v629 = vadd.f32 %v483, %v597
        %630 = vset.pattern.permute.xlu0 2
        %631 = vperm.xlu0 %630, %v336
        %v632 = vpop.permute.xlu0 %631
        %634 = vset.pattern.permute.xlu0 2
        %635 = vperm.xlu0 %634, %v337
        %v636 = vpop.permute.xlu0 %635
        %638 = vset.pattern.permute.xlu0 2
        %639 = vperm.xlu0 %638, %v338
        %v640 = vpop.permute.xlu0 %639
        %642 = vset.pattern.permute.xlu0 2
        %643 = vperm.xlu0 %642, %v339
        %v644 = vpop.permute.xlu0 %643
        %646 = vset.pattern.permute.xlu0 2
        %647 = vperm.xlu0 %646, %v340
        %v648 = vpop.permute.xlu0 %647
        %650 = vset.pattern.permute.xlu0 2
        %651 = vperm.xlu0 %650, %v341
        %v652 = vpop.permute.xlu0 %651
        %654 = vset.pattern.permute.xlu0 2
        %655 = vperm.xlu0 %654, %v342
        %v656 = vpop.permute.xlu0 %655
        %658 = vset.pattern.permute.xlu0 2
        %659 = vperm.xlu0 %658, %v343
        %v660 = vpop.permute.xlu0 %659
        %662 = vset.pattern.permute.xlu0 2
        %663 = vperm.xlu0 %662, %v344
        %v664 = vpop.permute.xlu0 %663
        %666 = vset.pattern.permute.xlu0 2
        %667 = vperm.xlu0 %666, %v345
        %v668 = vpop.permute.xlu0 %667
        %670 = vset.pattern.permute.xlu0 2
        %671 = vperm.xlu0 %670, %v346
        %v672 = vpop.permute.xlu0 %671
        %674 = vset.pattern.permute.xlu0 2
        %675 = vperm.xlu0 %674, %v347
        %v676 = vpop.permute.xlu0 %675
        %678 = vset.pattern.permute.xlu0 2
        %679 = vperm.xlu0 %678, %v348
        %v680 = vpop.permute.xlu0 %679
        %682 = vset.pattern.permute.xlu0 2
        %683 = vperm.xlu0 %682, %v349
        %v684 = vpop.permute.xlu0 %683
        %686 = vset.pattern.permute.xlu0 2
        %687 = vperm.xlu0 %686, %v350
        %v688 = vpop.permute.xlu0 %687
        %690 = vset.pattern.permute.xlu0 2
        %691 = vperm.xlu0 %690, %v351
        %v692 = vpop.permute.xlu0 %691
        %v694 = vlaneseq
        %v695 = vshrl.u32 %v694, 7
        %v696 = vsub.s32 2, %v695
        %v697 = vrot.slane %v352, %v696
        %v698 = vlaneseq
        %v699 = vshrl.u32 %v698, 7
        %v700 = vsub.s32 6, %v699
        %v701 = vrot.slane %v352, %v700
        %v704 = vlaneseq
        %v705 = vshrl.u32 %v704, 7
        %v706 = vsub.s32 2, %v705
        %v707 = vrot.slane %v697, %v706
        %v708 = vlaneseq
        %v709 = vshrl.u32 %v708, 7
        %v710 = vsub.s32 2, %v709
        %v711 = vrot.slane %v701, %v710
        %v712 = vmul.f32 %v632, %v707
        %v713 = vmul.f32 %v632, %v711
        %v714 = vmul.f32 %v636, %v707
        %v715 = vmul.f32 %v636, %v711
        %v716 = vmul.f32 %v640, %v707
        %v717 = vmul.f32 %v640, %v711
        %v718 = vmul.f32 %v644, %v707
        %v719 = vmul.f32 %v644, %v711
        %v720 = vmul.f32 %v648, %v707
        %v721 = vmul.f32 %v648, %v711
        %v722 = vmul.f32 %v652, %v707
        %v723 = vmul.f32 %v652, %v711
        %v724 = vmul.f32 %v656, %v707
        %v725 = vmul.f32 %v656, %v711
        %v726 = vmul.f32 %v660, %v707
        %v727 = vmul.f32 %v660, %v711
        %v728 = vmul.f32 %v664, %v707
        %v729 = vmul.f32 %v664, %v711
        %v730 = vmul.f32 %v668, %v707
        %v731 = vmul.f32 %v668, %v711
        %v732 = vmul.f32 %v672, %v707
        %v733 = vmul.f32 %v672, %v711
        %v734 = vmul.f32 %v676, %v707
        %v735 = vmul.f32 %v676, %v711
        %v736 = vmul.f32 %v680, %v707
        %v737 = vmul.f32 %v680, %v711
        %v738 = vmul.f32 %v684, %v707
        %v739 = vmul.f32 %v684, %v711
        %v740 = vmul.f32 %v688, %v707
        %v741 = vmul.f32 %v688, %v711
        %v742 = vmul.f32 %v692, %v707
        %v743 = vmul.f32 %v692, %v711
        %v744 = vadd.f32 %v598, %v712
        %v745 = vadd.f32 %v599, %v713
        %v746 = vadd.f32 %v600, %v714
        %v747 = vadd.f32 %v601, %v715
        %v748 = vadd.f32 %v602, %v716
        %v749 = vadd.f32 %v603, %v717
        %v750 = vadd.f32 %v604, %v718
        %v751 = vadd.f32 %v605, %v719
        %v752 = vadd.f32 %v606, %v720
        %v753 = vadd.f32 %v607, %v721
        %v754 = vadd.f32 %v608, %v722
        %v755 = vadd.f32 %v609, %v723
        %v756 = vadd.f32 %v610, %v724
        %v757 = vadd.f32 %v611, %v725
        %v758 = vadd.f32 %v612, %v726
        %v759 = vadd.f32 %v613, %v727
        %v760 = vadd.f32 %v614, %v728
        %v761 = vadd.f32 %v615, %v729
        %v762 = vadd.f32 %v616, %v730
        %v763 = vadd.f32 %v617, %v731
        %v764 = vadd.f32 %v618, %v732
        %v765 = vadd.f32 %v619, %v733
        %v766 = vadd.f32 %v620, %v734
        %v767 = vadd.f32 %v621, %v735
        %v768 = vadd.f32 %v622, %v736
        %v769 = vadd.f32 %v623, %v737
        %v770 = vadd.f32 %v624, %v738
        %v771 = vadd.f32 %v625, %v739
        %v772 = vadd.f32 %v626, %v740
        %v773 = vadd.f32 %v627, %v741
        %v774 = vadd.f32 %v628, %v742
        %v775 = vadd.f32 %v629, %v743
        %v776 = vmul.f32 %v336, %v336
        %v777 = vmul.f32 %v337, %v337
        %v778 = vmul.f32 %v338, %v338
        %v779 = vmul.f32 %v339, %v339
        %v780 = vmul.f32 %v340, %v340
        %v781 = vmul.f32 %v341, %v341
        %v782 = vmul.f32 %v342, %v342
        %v783 = vmul.f32 %v343, %v343
        %v784 = vmul.f32 %v344, %v344
        %v785 = vmul.f32 %v345, %v345
        %v786 = vmul.f32 %v346, %v346
        %v787 = vmul.f32 %v347, %v347
        %v788 = vmul.f32 %v348, %v348
        %v789 = vmul.f32 %v349, %v349
        %v790 = vmul.f32 %v350, %v350
        %v791 = vmul.f32 %v351, %v351
        %808 = vrot.lane.b32.xlu0 %v776, 127
        %v809 = vpop.permute.xlu0 %808
        %810 = vrot.lane.b32.xlu0 %v777, 127
        %v811 = vpop.permute.xlu0 %810
        %812 = vrot.lane.b32.xlu0 %v778, 127
        %v813 = vpop.permute.xlu0 %812
        %814 = vrot.lane.b32.xlu0 %v779, 127
        %v815 = vpop.permute.xlu0 %814
        %816 = vrot.lane.b32.xlu0 %v780, 127
        %v817 = vpop.permute.xlu0 %816
        %818 = vrot.lane.b32.xlu0 %v781, 127
        %v819 = vpop.permute.xlu0 %818
        %820 = vrot.lane.b32.xlu0 %v782, 127
        %v821 = vpop.permute.xlu0 %820
        %822 = vrot.lane.b32.xlu0 %v783, 127
        %v823 = vpop.permute.xlu0 %822
        %824 = vrot.lane.b32.xlu0 %v784, 127
        %v825 = vpop.permute.xlu0 %824
        %826 = vrot.lane.b32.xlu0 %v785, 127
        %v827 = vpop.permute.xlu0 %826
        %828 = vrot.lane.b32.xlu0 %v786, 127
        %v829 = vpop.permute.xlu0 %828
        %830 = vrot.lane.b32.xlu0 %v787, 127
        %v831 = vpop.permute.xlu0 %830
        %832 = vrot.lane.b32.xlu0 %v788, 127
        %v833 = vpop.permute.xlu0 %832
        %834 = vrot.lane.b32.xlu0 %v789, 127
        %v835 = vpop.permute.xlu0 %834
        %836 = vrot.lane.b32.xlu0 %v790, 127
        %v837 = vpop.permute.xlu0 %836
        %838 = vrot.lane.b32.xlu0 %v791, 127
        %v839 = vpop.permute.xlu0 %838
        %v856 = vadd.f32 %v776, %v809
        %v857 = vadd.f32 %v777, %v811
        %v858 = vadd.f32 %v778, %v813
        %v859 = vadd.f32 %v779, %v815
        %v860 = vadd.f32 %v780, %v817
        %v861 = vadd.f32 %v781, %v819
        %v862 = vadd.f32 %v782, %v821
        %v863 = vadd.f32 %v783, %v823
        %v864 = vadd.f32 %v784, %v825
        %v865 = vadd.f32 %v785, %v827
        %v866 = vadd.f32 %v786, %v829
        %v867 = vadd.f32 %v787, %v831
        %v868 = vadd.f32 %v788, %v833
        %v869 = vadd.f32 %v789, %v835
        %v870 = vadd.f32 %v790, %v837
        %v871 = vadd.f32 %v791, %v839
        %872 = vrot.lane.b32.xlu0 %v776, 126
        %v873 = vpop.permute.xlu0 %872
        %874 = vrot.lane.b32.xlu0 %v777, 126
        %v875 = vpop.permute.xlu0 %874
        %876 = vrot.lane.b32.xlu0 %v778, 126
        %v877 = vpop.permute.xlu0 %876
        %878 = vrot.lane.b32.xlu0 %v779, 126
        %v879 = vpop.permute.xlu0 %878
        %880 = vrot.lane.b32.xlu0 %v780, 126
        %v881 = vpop.permute.xlu0 %880
        %882 = vrot.lane.b32.xlu0 %v781, 126
        %v883 = vpop.permute.xlu0 %882
        %884 = vrot.lane.b32.xlu0 %v782, 126
        %v885 = vpop.permute.xlu0 %884
        %886 = vrot.lane.b32.xlu0 %v783, 126
        %v887 = vpop.permute.xlu0 %886
        %888 = vrot.lane.b32.xlu0 %v784, 126
        %v889 = vpop.permute.xlu0 %888
        %890 = vrot.lane.b32.xlu0 %v785, 126
        %v891 = vpop.permute.xlu0 %890
        %892 = vrot.lane.b32.xlu0 %v786, 126
        %v893 = vpop.permute.xlu0 %892
        %894 = vrot.lane.b32.xlu0 %v787, 126
        %v895 = vpop.permute.xlu0 %894
        %896 = vrot.lane.b32.xlu0 %v788, 126
        %v897 = vpop.permute.xlu0 %896
        %898 = vrot.lane.b32.xlu0 %v789, 126
        %v899 = vpop.permute.xlu0 %898
        %900 = vrot.lane.b32.xlu0 %v790, 126
        %v901 = vpop.permute.xlu0 %900
        %902 = vrot.lane.b32.xlu0 %v791, 126
        %v903 = vpop.permute.xlu0 %902
        %v920 = vadd.f32 %v856, %v873
        %v921 = vadd.f32 %v857, %v875
        %v922 = vadd.f32 %v858, %v877
        %v923 = vadd.f32 %v859, %v879
        %v924 = vadd.f32 %v860, %v881
        %v925 = vadd.f32 %v861, %v883
        %v926 = vadd.f32 %v862, %v885
        %v927 = vadd.f32 %v863, %v887
        %v928 = vadd.f32 %v864, %v889
        %v929 = vadd.f32 %v865, %v891
        %v930 = vadd.f32 %v866, %v893
        %v931 = vadd.f32 %v867, %v895
        %v932 = vadd.f32 %v868, %v897
        %v933 = vadd.f32 %v869, %v899
        %v934 = vadd.f32 %v870, %v901
        %v935 = vadd.f32 %v871, %v903
        %937 = vset.pattern.permute.xlu0 0
        %938 = vperm.xlu0 %937, %v920
        %v939 = vpop.permute.xlu0 %938
        %942 = vset.pattern.permute.xlu0 0
        %943 = vperm.xlu0 %942, %v921
        %v944 = vpop.permute.xlu0 %943
        %947 = vset.pattern.permute.xlu0 0
        %948 = vperm.xlu0 %947, %v922
        %v949 = vpop.permute.xlu0 %948
        %952 = vset.pattern.permute.xlu0 0
        %953 = vperm.xlu0 %952, %v923
        %v954 = vpop.permute.xlu0 %953
        %957 = vset.pattern.permute.xlu0 0
        %958 = vperm.xlu0 %957, %v924
        %v959 = vpop.permute.xlu0 %958
        %962 = vset.pattern.permute.xlu0 0
        %963 = vperm.xlu0 %962, %v925
        %v964 = vpop.permute.xlu0 %963
        %967 = vset.pattern.permute.xlu0 0
        %968 = vperm.xlu0 %967, %v926
        %v969 = vpop.permute.xlu0 %968
        %972 = vset.pattern.permute.xlu0 0
        %973 = vperm.xlu0 %972, %v927
        %v974 = vpop.permute.xlu0 %973
        %977 = vset.pattern.permute.xlu0 0
        %978 = vperm.xlu0 %977, %v928
        %v979 = vpop.permute.xlu0 %978
        %982 = vset.pattern.permute.xlu0 0
        %983 = vperm.xlu0 %982, %v929
        %v984 = vpop.permute.xlu0 %983
        %987 = vset.pattern.permute.xlu0 0
        %988 = vperm.xlu0 %987, %v930
        %v989 = vpop.permute.xlu0 %988
        %992 = vset.pattern.permute.xlu0 0
        %993 = vperm.xlu0 %992, %v931
        %v994 = vpop.permute.xlu0 %993
        %997 = vset.pattern.permute.xlu0 0
        %998 = vperm.xlu0 %997, %v932
        %v999 = vpop.permute.xlu0 %998
        %1002 = vset.pattern.permute.xlu0 0
        %1003 = vperm.xlu0 %1002, %v933
        %v1004 = vpop.permute.xlu0 %1003
        %1007 = vset.pattern.permute.xlu0 0
        %1008 = vperm.xlu0 %1007, %v934
        %v1009 = vpop.permute.xlu0 %1008
        %1012 = vset.pattern.permute.xlu0 0
        %1013 = vperm.xlu0 %1012, %v935
        %v1014 = vpop.permute.xlu0 %1013
        %v1016 = vlaneseq
        %v1017 = vshrl.u32 %v1016, 7
        %v1018 = vsub.s32 3, %v1017
        %v1019 = vrot.slane %v352, %v1018
        %v1020 = vlaneseq
        %v1021 = vshrl.u32 %v1020, 7
        %v1022 = vsub.s32 7, %v1021
        %v1023 = vrot.slane %v352, %v1022
        %v1026 = vlaneseq
        %v1027 = vshrl.u32 %v1026, 7
        %v1028 = vsub.s32 3, %v1027
        %v1029 = vrot.slane %v1019, %v1028
        %v1030 = vlaneseq
        %v1031 = vshrl.u32 %v1030, 7
        %v1032 = vsub.s32 3, %v1031
        %v1033 = vrot.slane %v1023, %v1032
        %v1034 = vadd.f32 %v939, %v1029
        %v1035 = vadd.f32 %v939, %v1033
        %v1036 = vadd.f32 %v944, %v1029
        %v1037 = vadd.f32 %v944, %v1033
        %v1038 = vadd.f32 %v949, %v1029
        %v1039 = vadd.f32 %v949, %v1033
        %v1040 = vadd.f32 %v954, %v1029
        %v1041 = vadd.f32 %v954, %v1033
        %v1042 = vadd.f32 %v959, %v1029
        %v1043 = vadd.f32 %v959, %v1033
        %v1044 = vadd.f32 %v964, %v1029
        %v1045 = vadd.f32 %v964, %v1033
        %v1046 = vadd.f32 %v969, %v1029
        %v1047 = vadd.f32 %v969, %v1033
        %v1048 = vadd.f32 %v974, %v1029
        %v1049 = vadd.f32 %v974, %v1033
        %v1050 = vadd.f32 %v979, %v1029
        %v1051 = vadd.f32 %v979, %v1033
        %v1052 = vadd.f32 %v984, %v1029
        %v1053 = vadd.f32 %v984, %v1033
        %v1054 = vadd.f32 %v989, %v1029
        %v1055 = vadd.f32 %v989, %v1033
        %v1056 = vadd.f32 %v994, %v1029
        %v1057 = vadd.f32 %v994, %v1033
        %v1058 = vadd.f32 %v999, %v1029
        %v1059 = vadd.f32 %v999, %v1033
        %v1060 = vadd.f32 %v1004, %v1029
        %v1061 = vadd.f32 %v1004, %v1033
        %v1062 = vadd.f32 %v1009, %v1029
        %v1063 = vadd.f32 %v1009, %v1033
        %v1064 = vadd.f32 %v1014, %v1029
        %v1065 = vadd.f32 %v1014, %v1033
        %v1066 = vmul.f32 %v744, 2.0
        %v1067 = vmul.f32 %v745, 2.0
        %v1068 = vmul.f32 %v746, 2.0
        %v1069 = vmul.f32 %v747, 2.0
        %v1070 = vmul.f32 %v748, 2.0
        %v1071 = vmul.f32 %v749, 2.0
        %v1072 = vmul.f32 %v750, 2.0
        %v1073 = vmul.f32 %v751, 2.0
        %v1074 = vmul.f32 %v752, 2.0
        %v1075 = vmul.f32 %v753, 2.0
        %v1076 = vmul.f32 %v754, 2.0
        %v1077 = vmul.f32 %v755, 2.0
        %v1078 = vmul.f32 %v756, 2.0
        %v1079 = vmul.f32 %v757, 2.0
        %v1080 = vmul.f32 %v758, 2.0
        %v1081 = vmul.f32 %v759, 2.0
        %v1082 = vmul.f32 %v760, 2.0
        %v1083 = vmul.f32 %v761, 2.0
        %v1084 = vmul.f32 %v762, 2.0
        %v1085 = vmul.f32 %v763, 2.0
        %v1086 = vmul.f32 %v764, 2.0
        %v1087 = vmul.f32 %v765, 2.0
        %v1088 = vmul.f32 %v766, 2.0
        %v1089 = vmul.f32 %v767, 2.0
        %v1090 = vmul.f32 %v768, 2.0
        %v1091 = vmul.f32 %v769, 2.0
        %v1092 = vmul.f32 %v770, 2.0
        %v1093 = vmul.f32 %v771, 2.0
        %v1094 = vmul.f32 %v772, 2.0
        %v1095 = vmul.f32 %v773, 2.0
        %v1096 = vmul.f32 %v774, 2.0
        %v1097 = vmul.f32 %v775, 2.0
        %v1098 = vsub.f32 %v1034, %v1066
        %v1099 = vsub.f32 %v1035, %v1067
        %v1100 = vsub.f32 %v1036, %v1068
        %v1101 = vsub.f32 %v1037, %v1069
        %v1102 = vsub.f32 %v1038, %v1070
        %v1103 = vsub.f32 %v1039, %v1071
        %v1104 = vsub.f32 %v1040, %v1072
        %v1105 = vsub.f32 %v1041, %v1073
        %v1106 = vsub.f32 %v1042, %v1074
        %v1107 = vsub.f32 %v1043, %v1075
        %v1108 = vsub.f32 %v1044, %v1076
        %v1109 = vsub.f32 %v1045, %v1077
        %v1110 = vsub.f32 %v1046, %v1078
        %v1111 = vsub.f32 %v1047, %v1079
        %v1112 = vsub.f32 %v1048, %v1080
        %v1113 = vsub.f32 %v1049, %v1081
        %v1114 = vsub.f32 %v1050, %v1082
        %v1115 = vsub.f32 %v1051, %v1083
        %v1116 = vsub.f32 %v1052, %v1084
        %v1117 = vsub.f32 %v1053, %v1085
        %v1118 = vsub.f32 %v1054, %v1086
        %v1119 = vsub.f32 %v1055, %v1087
        %v1120 = vsub.f32 %v1056, %v1088
        %v1121 = vsub.f32 %v1057, %v1089
        %v1122 = vsub.f32 %v1058, %v1090
        %v1123 = vsub.f32 %v1059, %v1091
        %v1124 = vsub.f32 %v1060, %v1092
        %v1125 = vsub.f32 %v1061, %v1093
        %v1126 = vsub.f32 %v1062, %v1094
        %v1127 = vsub.f32 %v1063, %v1095
        %v1128 = vsub.f32 %v1064, %v1096
        %v1129 = vsub.f32 %v1065, %v1097
        %v1130 = vmax.f32 %v1098, 0.0
        %v1131 = vmax.f32 %v1099, 0.0
        %v1132 = vmax.f32 %v1100, 0.0
        %v1133 = vmax.f32 %v1101, 0.0
        %v1134 = vmax.f32 %v1102, 0.0
        %v1135 = vmax.f32 %v1103, 0.0
        %v1136 = vmax.f32 %v1104, 0.0
        %v1137 = vmax.f32 %v1105, 0.0
        %v1138 = vmax.f32 %v1106, 0.0
        %v1139 = vmax.f32 %v1107, 0.0
        %v1140 = vmax.f32 %v1108, 0.0
        %v1141 = vmax.f32 %v1109, 0.0
        %v1142 = vmax.f32 %v1110, 0.0
        %v1143 = vmax.f32 %v1111, 0.0
        %v1144 = vmax.f32 %v1112, 0.0
        %v1145 = vmax.f32 %v1113, 0.0
        %v1146 = vmax.f32 %v1114, 0.0
        %v1147 = vmax.f32 %v1115, 0.0
        %v1148 = vmax.f32 %v1116, 0.0
        %v1149 = vmax.f32 %v1117, 0.0
        %v1150 = vmax.f32 %v1118, 0.0
        %v1151 = vmax.f32 %v1119, 0.0
        %v1152 = vmax.f32 %v1120, 0.0
        %v1153 = vmax.f32 %v1121, 0.0
        %v1154 = vmax.f32 %v1122, 0.0
        %v1155 = vmax.f32 %v1123, 0.0
        %v1156 = vmax.f32 %v1124, 0.0
        %v1157 = vmax.f32 %v1125, 0.0
        %v1158 = vmax.f32 %v1126, 0.0
        %v1159 = vmax.f32 %v1127, 0.0
        %v1160 = vmax.f32 %v1128, 0.0
        %v1161 = vmax.f32 %v1129, 0.0
        %v1162 = vrsqrt.pop %v1130
        %v1163 = vmul.f32 %v1130, %v1162
        %vm1164 = vcmp.eq.f32.partialorder %v1130, inf
        %v1165 = vsel %vm1164, %v1130, %v1163
        %vm1166 = vcmp.eq.f32.partialorder %v1130, 0.0
        %v1167 = vand.u32 %v1130, 2147483648
        %v1168 = vsel %vm1166, %v1167, %v1165
        %v1169 = vrsqrt.pop %v1131
        %v1170 = vmul.f32 %v1131, %v1169
        %vm1171 = vcmp.eq.f32.partialorder %v1131, inf
        %v1172 = vsel %vm1171, %v1131, %v1170
        %vm1173 = vcmp.eq.f32.partialorder %v1131, 0.0
        %v1174 = vand.u32 %v1131, 2147483648
        %v1175 = vsel %vm1173, %v1174, %v1172
        %v1176 = vrsqrt.pop %v1132
        %v1177 = vmul.f32 %v1132, %v1176
        %vm1178 = vcmp.eq.f32.partialorder %v1132, inf
        %v1179 = vsel %vm1178, %v1132, %v1177
        %vm1180 = vcmp.eq.f32.partialorder %v1132, 0.0
        %v1181 = vand.u32 %v1132, 2147483648
        %v1182 = vsel %vm1180, %v1181, %v1179
        %v1183 = vrsqrt.pop %v1133
        %v1184 = vmul.f32 %v1133, %v1183
        %vm1185 = vcmp.eq.f32.partialorder %v1133, inf
        %v1186 = vsel %vm1185, %v1133, %v1184
        %vm1187 = vcmp.eq.f32.partialorder %v1133, 0.0
        %v1188 = vand.u32 %v1133, 2147483648
        %v1189 = vsel %vm1187, %v1188, %v1186
        %v1190 = vrsqrt.pop %v1134
        %v1191 = vmul.f32 %v1134, %v1190
        %vm1192 = vcmp.eq.f32.partialorder %v1134, inf
        %v1193 = vsel %vm1192, %v1134, %v1191
        %vm1194 = vcmp.eq.f32.partialorder %v1134, 0.0
        %v1195 = vand.u32 %v1134, 2147483648
        %v1196 = vsel %vm1194, %v1195, %v1193
        %v1197 = vrsqrt.pop %v1135
        %v1198 = vmul.f32 %v1135, %v1197
        %vm1199 = vcmp.eq.f32.partialorder %v1135, inf
        %v1200 = vsel %vm1199, %v1135, %v1198
        %vm1201 = vcmp.eq.f32.partialorder %v1135, 0.0
        %v1202 = vand.u32 %v1135, 2147483648
        %v1203 = vsel %vm1201, %v1202, %v1200
        %v1204 = vrsqrt.pop %v1136
        %v1205 = vmul.f32 %v1136, %v1204
        %vm1206 = vcmp.eq.f32.partialorder %v1136, inf
        %v1207 = vsel %vm1206, %v1136, %v1205
        %vm1208 = vcmp.eq.f32.partialorder %v1136, 0.0
        %v1209 = vand.u32 %v1136, 2147483648
        %v1210 = vsel %vm1208, %v1209, %v1207
        %v1211 = vrsqrt.pop %v1137
        %v1212 = vmul.f32 %v1137, %v1211
        %vm1213 = vcmp.eq.f32.partialorder %v1137, inf
        %v1214 = vsel %vm1213, %v1137, %v1212
        %vm1215 = vcmp.eq.f32.partialorder %v1137, 0.0
        %v1216 = vand.u32 %v1137, 2147483648
        %v1217 = vsel %vm1215, %v1216, %v1214
        %v1218 = vrsqrt.pop %v1138
        %v1219 = vmul.f32 %v1138, %v1218
        %vm1220 = vcmp.eq.f32.partialorder %v1138, inf
        %v1221 = vsel %vm1220, %v1138, %v1219
        %vm1222 = vcmp.eq.f32.partialorder %v1138, 0.0
        %v1223 = vand.u32 %v1138, 2147483648
        %v1224 = vsel %vm1222, %v1223, %v1221
        %v1225 = vrsqrt.pop %v1139
        %v1226 = vmul.f32 %v1139, %v1225
        %vm1227 = vcmp.eq.f32.partialorder %v1139, inf
        %v1228 = vsel %vm1227, %v1139, %v1226
        %vm1229 = vcmp.eq.f32.partialorder %v1139, 0.0
        %v1230 = vand.u32 %v1139, 2147483648
        %v1231 = vsel %vm1229, %v1230, %v1228
        %v1232 = vrsqrt.pop %v1140
        %v1233 = vmul.f32 %v1140, %v1232
        %vm1234 = vcmp.eq.f32.partialorder %v1140, inf
        %v1235 = vsel %vm1234, %v1140, %v1233
        %vm1236 = vcmp.eq.f32.partialorder %v1140, 0.0
        %v1237 = vand.u32 %v1140, 2147483648
        %v1238 = vsel %vm1236, %v1237, %v1235
        %v1239 = vrsqrt.pop %v1141
        %v1240 = vmul.f32 %v1141, %v1239
        %vm1241 = vcmp.eq.f32.partialorder %v1141, inf
        %v1242 = vsel %vm1241, %v1141, %v1240
        %vm1243 = vcmp.eq.f32.partialorder %v1141, 0.0
        %v1244 = vand.u32 %v1141, 2147483648
        %v1245 = vsel %vm1243, %v1244, %v1242
        %v1246 = vrsqrt.pop %v1142
        %v1247 = vmul.f32 %v1142, %v1246
        %vm1248 = vcmp.eq.f32.partialorder %v1142, inf
        %v1249 = vsel %vm1248, %v1142, %v1247
        %vm1250 = vcmp.eq.f32.partialorder %v1142, 0.0
        %v1251 = vand.u32 %v1142, 2147483648
        %v1252 = vsel %vm1250, %v1251, %v1249
        %v1253 = vrsqrt.pop %v1143
        %v1254 = vmul.f32 %v1143, %v1253
        %vm1255 = vcmp.eq.f32.partialorder %v1143, inf
        %v1256 = vsel %vm1255, %v1143, %v1254
        %vm1257 = vcmp.eq.f32.partialorder %v1143, 0.0
        %v1258 = vand.u32 %v1143, 2147483648
        %v1259 = vsel %vm1257, %v1258, %v1256
        %v1260 = vrsqrt.pop %v1144
        %v1261 = vmul.f32 %v1144, %v1260
        %vm1262 = vcmp.eq.f32.partialorder %v1144, inf
        %v1263 = vsel %vm1262, %v1144, %v1261
        %vm1264 = vcmp.eq.f32.partialorder %v1144, 0.0
        %v1265 = vand.u32 %v1144, 2147483648
        %v1266 = vsel %vm1264, %v1265, %v1263
        %v1267 = vrsqrt.pop %v1145
        %v1268 = vmul.f32 %v1145, %v1267
        %vm1269 = vcmp.eq.f32.partialorder %v1145, inf
        %v1270 = vsel %vm1269, %v1145, %v1268
        %vm1271 = vcmp.eq.f32.partialorder %v1145, 0.0
        %v1272 = vand.u32 %v1145, 2147483648
        %v1273 = vsel %vm1271, %v1272, %v1270
        %v1274 = vrsqrt.pop %v1146
        %v1275 = vmul.f32 %v1146, %v1274
        %vm1276 = vcmp.eq.f32.partialorder %v1146, inf
        %v1277 = vsel %vm1276, %v1146, %v1275
        %vm1278 = vcmp.eq.f32.partialorder %v1146, 0.0
        %v1279 = vand.u32 %v1146, 2147483648
        %v1280 = vsel %vm1278, %v1279, %v1277
        %v1281 = vrsqrt.pop %v1147
        %v1282 = vmul.f32 %v1147, %v1281
        %vm1283 = vcmp.eq.f32.partialorder %v1147, inf
        %v1284 = vsel %vm1283, %v1147, %v1282
        %vm1285 = vcmp.eq.f32.partialorder %v1147, 0.0
        %v1286 = vand.u32 %v1147, 2147483648
        %v1287 = vsel %vm1285, %v1286, %v1284
        %v1288 = vrsqrt.pop %v1148
        %v1289 = vmul.f32 %v1148, %v1288
        %vm1290 = vcmp.eq.f32.partialorder %v1148, inf
        %v1291 = vsel %vm1290, %v1148, %v1289
        %vm1292 = vcmp.eq.f32.partialorder %v1148, 0.0
        %v1293 = vand.u32 %v1148, 2147483648
        %v1294 = vsel %vm1292, %v1293, %v1291
        %v1295 = vrsqrt.pop %v1149
        %v1296 = vmul.f32 %v1149, %v1295
        %vm1297 = vcmp.eq.f32.partialorder %v1149, inf
        %v1298 = vsel %vm1297, %v1149, %v1296
        %vm1299 = vcmp.eq.f32.partialorder %v1149, 0.0
        %v1300 = vand.u32 %v1149, 2147483648
        %v1301 = vsel %vm1299, %v1300, %v1298
        %v1302 = vrsqrt.pop %v1150
        %v1303 = vmul.f32 %v1150, %v1302
        %vm1304 = vcmp.eq.f32.partialorder %v1150, inf
        %v1305 = vsel %vm1304, %v1150, %v1303
        %vm1306 = vcmp.eq.f32.partialorder %v1150, 0.0
        %v1307 = vand.u32 %v1150, 2147483648
        %v1308 = vsel %vm1306, %v1307, %v1305
        %v1309 = vrsqrt.pop %v1151
        %v1310 = vmul.f32 %v1151, %v1309
        %vm1311 = vcmp.eq.f32.partialorder %v1151, inf
        %v1312 = vsel %vm1311, %v1151, %v1310
        %vm1313 = vcmp.eq.f32.partialorder %v1151, 0.0
        %v1314 = vand.u32 %v1151, 2147483648
        %v1315 = vsel %vm1313, %v1314, %v1312
        %v1316 = vrsqrt.pop %v1152
        %v1317 = vmul.f32 %v1152, %v1316
        %vm1318 = vcmp.eq.f32.partialorder %v1152, inf
        %v1319 = vsel %vm1318, %v1152, %v1317
        %vm1320 = vcmp.eq.f32.partialorder %v1152, 0.0
        %v1321 = vand.u32 %v1152, 2147483648
        %v1322 = vsel %vm1320, %v1321, %v1319
        %v1323 = vrsqrt.pop %v1153
        %v1324 = vmul.f32 %v1153, %v1323
        %vm1325 = vcmp.eq.f32.partialorder %v1153, inf
        %v1326 = vsel %vm1325, %v1153, %v1324
        %vm1327 = vcmp.eq.f32.partialorder %v1153, 0.0
        %v1328 = vand.u32 %v1153, 2147483648
        %v1329 = vsel %vm1327, %v1328, %v1326
        %v1330 = vrsqrt.pop %v1154
        %v1331 = vmul.f32 %v1154, %v1330
        %vm1332 = vcmp.eq.f32.partialorder %v1154, inf
        %v1333 = vsel %vm1332, %v1154, %v1331
        %vm1334 = vcmp.eq.f32.partialorder %v1154, 0.0
        %v1335 = vand.u32 %v1154, 2147483648
        %v1336 = vsel %vm1334, %v1335, %v1333
        %v1337 = vrsqrt.pop %v1155
        %v1338 = vmul.f32 %v1155, %v1337
        %vm1339 = vcmp.eq.f32.partialorder %v1155, inf
        %v1340 = vsel %vm1339, %v1155, %v1338
        %vm1341 = vcmp.eq.f32.partialorder %v1155, 0.0
        %v1342 = vand.u32 %v1155, 2147483648
        %v1343 = vsel %vm1341, %v1342, %v1340
        %v1344 = vrsqrt.pop %v1156
        %v1345 = vmul.f32 %v1156, %v1344
        %vm1346 = vcmp.eq.f32.partialorder %v1156, inf
        %v1347 = vsel %vm1346, %v1156, %v1345
        %vm1348 = vcmp.eq.f32.partialorder %v1156, 0.0
        %v1349 = vand.u32 %v1156, 2147483648
        %v1350 = vsel %vm1348, %v1349, %v1347
        %v1351 = vrsqrt.pop %v1157
        %v1352 = vmul.f32 %v1157, %v1351
        %vm1353 = vcmp.eq.f32.partialorder %v1157, inf
        %v1354 = vsel %vm1353, %v1157, %v1352
        %vm1355 = vcmp.eq.f32.partialorder %v1157, 0.0
        %v1356 = vand.u32 %v1157, 2147483648
        %v1357 = vsel %vm1355, %v1356, %v1354
        %v1358 = vrsqrt.pop %v1158
        %v1359 = vmul.f32 %v1158, %v1358
        %vm1360 = vcmp.eq.f32.partialorder %v1158, inf
        %v1361 = vsel %vm1360, %v1158, %v1359
        %vm1362 = vcmp.eq.f32.partialorder %v1158, 0.0
        %v1363 = vand.u32 %v1158, 2147483648
        %v1364 = vsel %vm1362, %v1363, %v1361
        %v1365 = vrsqrt.pop %v1159
        %v1366 = vmul.f32 %v1159, %v1365
        %vm1367 = vcmp.eq.f32.partialorder %v1159, inf
        %v1368 = vsel %vm1367, %v1159, %v1366
        %vm1369 = vcmp.eq.f32.partialorder %v1159, 0.0
        %v1370 = vand.u32 %v1159, 2147483648
        %v1371 = vsel %vm1369, %v1370, %v1368
        %v1372 = vrsqrt.pop %v1160
        %v1373 = vmul.f32 %v1160, %v1372
        %vm1374 = vcmp.eq.f32.partialorder %v1160, inf
        %v1375 = vsel %vm1374, %v1160, %v1373
        %vm1376 = vcmp.eq.f32.partialorder %v1160, 0.0
        %v1377 = vand.u32 %v1160, 2147483648
        %v1378 = vsel %vm1376, %v1377, %v1375
        %v1379 = vrsqrt.pop %v1161
        %v1380 = vmul.f32 %v1161, %v1379
        %vm1381 = vcmp.eq.f32.partialorder %v1161, inf
        %v1382 = vsel %vm1381, %v1161, %v1380
        %vm1383 = vcmp.eq.f32.partialorder %v1161, 0.0
        %v1384 = vand.u32 %v1161, 2147483648
        %v1385 = vsel %vm1383, %v1384, %v1382
        %v1386 = vmul.f32 %v1168, 2.0
        %v1387 = vmul.f32 %v1175, 2.0
        %v1388 = vmul.f32 %v1182, 2.0
        %v1389 = vmul.f32 %v1189, 2.0
        %v1390 = vmul.f32 %v1196, 2.0
        %v1391 = vmul.f32 %v1203, 2.0
        %v1392 = vmul.f32 %v1210, 2.0
        %v1393 = vmul.f32 %v1217, 2.0
        %v1394 = vmul.f32 %v1224, 2.0
        %v1395 = vmul.f32 %v1231, 2.0
        %v1396 = vmul.f32 %v1238, 2.0
        %v1397 = vmul.f32 %v1245, 2.0
        %v1398 = vmul.f32 %v1252, 2.0
        %v1399 = vmul.f32 %v1259, 2.0
        %v1400 = vmul.f32 %v1266, 2.0
        %v1401 = vmul.f32 %v1273, 2.0
        %v1402 = vmul.f32 %v1280, 2.0
        %v1403 = vmul.f32 %v1287, 2.0
        %v1404 = vmul.f32 %v1294, 2.0
        %v1405 = vmul.f32 %v1301, 2.0
        %v1406 = vmul.f32 %v1308, 2.0
        %v1407 = vmul.f32 %v1315, 2.0
        %v1408 = vmul.f32 %v1322, 2.0
        %v1409 = vmul.f32 %v1329, 2.0
        %v1410 = vmul.f32 %v1336, 2.0
        %v1411 = vmul.f32 %v1343, 2.0
        %v1412 = vmul.f32 %v1350, 2.0
        %v1413 = vmul.f32 %v1357, 2.0
        %v1414 = vmul.f32 %v1364, 2.0
        %v1415 = vmul.f32 %v1371, 2.0
        %v1416 = vmul.f32 %v1378, 2.0
        %v1417 = vmul.f32 %v1385, 2.0
        %v1418 = vsub.f32 1.0, %v1386
        %v1419 = vsub.f32 1.0, %v1387
        %v1420 = vsub.f32 1.0, %v1388
        %v1421 = vsub.f32 1.0, %v1389
        %v1422 = vsub.f32 1.0, %v1390
        %v1423 = vsub.f32 1.0, %v1391
        %v1424 = vsub.f32 1.0, %v1392
        %v1425 = vsub.f32 1.0, %v1393
        %v1426 = vsub.f32 1.0, %v1394
        %v1427 = vsub.f32 1.0, %v1395
        %v1428 = vsub.f32 1.0, %v1396
        %v1429 = vsub.f32 1.0, %v1397
        %v1430 = vsub.f32 1.0, %v1398
        %v1431 = vsub.f32 1.0, %v1399
        %v1432 = vsub.f32 1.0, %v1400
        %v1433 = vsub.f32 1.0, %v1401
        %v1434 = vsub.f32 1.0, %v1402
        %v1435 = vsub.f32 1.0, %v1403
        %v1436 = vsub.f32 1.0, %v1404
        %v1437 = vsub.f32 1.0, %v1405
        %v1438 = vsub.f32 1.0, %v1406
        %v1439 = vsub.f32 1.0, %v1407
        %v1440 = vsub.f32 1.0, %v1408
        %v1441 = vsub.f32 1.0, %v1409
        %v1442 = vsub.f32 1.0, %v1410
        %v1443 = vsub.f32 1.0, %v1411
        %v1444 = vsub.f32 1.0, %v1412
        %v1445 = vsub.f32 1.0, %v1413
        %v1446 = vsub.f32 1.0, %v1414
        %v1447 = vsub.f32 1.0, %v1415
        %v1448 = vsub.f32 1.0, %v1416
        %v1449 = vsub.f32 1.0, %v1417
        %v1450 = vmax.f32 %v1418, 0.0
        %v1451 = vmax.f32 %v1419, 0.0
        %v1452 = vmax.f32 %v1420, 0.0
        %v1453 = vmax.f32 %v1421, 0.0
        %v1454 = vmax.f32 %v1422, 0.0
        %v1455 = vmax.f32 %v1423, 0.0
        %v1456 = vmax.f32 %v1424, 0.0
        %v1457 = vmax.f32 %v1425, 0.0
        %v1458 = vmax.f32 %v1426, 0.0
        %v1459 = vmax.f32 %v1427, 0.0
        %v1460 = vmax.f32 %v1428, 0.0
        %v1461 = vmax.f32 %v1429, 0.0
        %v1462 = vmax.f32 %v1430, 0.0
        %v1463 = vmax.f32 %v1431, 0.0
        %v1464 = vmax.f32 %v1432, 0.0
        %v1465 = vmax.f32 %v1433, 0.0
        %v1466 = vmax.f32 %v1434, 0.0
        %v1467 = vmax.f32 %v1435, 0.0
        %v1468 = vmax.f32 %v1436, 0.0
        %v1469 = vmax.f32 %v1437, 0.0
        %v1470 = vmax.f32 %v1438, 0.0
        %v1471 = vmax.f32 %v1439, 0.0
        %v1472 = vmax.f32 %v1440, 0.0
        %v1473 = vmax.f32 %v1441, 0.0
        %v1474 = vmax.f32 %v1442, 0.0
        %v1475 = vmax.f32 %v1443, 0.0
        %v1476 = vmax.f32 %v1444, 0.0
        %v1477 = vmax.f32 %v1445, 0.0
        %v1478 = vmax.f32 %v1446, 0.0
        %v1479 = vmax.f32 %v1447, 0.0
        %v1480 = vmax.f32 %v1448, 0.0
        %v1481 = vmax.f32 %v1449, 0.0
        %v1482 = vld [vmem:[%s326] sm:$0xf]
        %v1483 = vld [vmem:[%s326 + $0x4] sm:$0xf]
        %v1484 = vld [vmem:[%s326 + $0x8] sm:$0xf]
        %v1485 = vld [vmem:[%s326 + $0xc] sm:$0xf]
        %v1486 = vld [vmem:[%s326 + $0x10] sm:$0xf]
        %v1487 = vld [vmem:[%s326 + $0x14] sm:$0xf]
        %v1488 = vld [vmem:[%s326 + $0x18] sm:$0xf]
        %v1489 = vld [vmem:[%s326 + $0x1c] sm:$0xf]
        %v1490 = vld [vmem:[%s326 + $0x20] sm:$0xf]
        %v1491 = vld [vmem:[%s326 + $0x24] sm:$0xf]
        %v1492 = vld [vmem:[%s326 + $0x28] sm:$0xf]
        %v1493 = vld [vmem:[%s326 + $0x2c] sm:$0xf]
        %v1494 = vld [vmem:[%s326 + $0x30] sm:$0xf]
        %v1495 = vld [vmem:[%s326 + $0x34] sm:$0xf]
        %v1496 = vld [vmem:[%s326 + $0x38] sm:$0xf]
        %v1497 = vld [vmem:[%s326 + $0x3c] sm:$0xf]
        %v1498 = vunpack.c.l.bf16 %v1482
        %v1499 = vunpack.c.l.bf16 %v1483
        %v1500 = vunpack.c.l.bf16 %v1484
        %v1501 = vunpack.c.l.bf16 %v1485
        %v1502 = vunpack.c.l.bf16 %v1486
        %v1503 = vunpack.c.l.bf16 %v1487
        %v1504 = vunpack.c.l.bf16 %v1488
        %v1505 = vunpack.c.l.bf16 %v1489
        %v1506 = vunpack.c.l.bf16 %v1490
        %v1507 = vunpack.c.l.bf16 %v1491
        %v1508 = vunpack.c.l.bf16 %v1492
        %v1509 = vunpack.c.l.bf16 %v1493
        %v1510 = vunpack.c.l.bf16 %v1494
        %v1511 = vunpack.c.l.bf16 %v1495
        %v1512 = vunpack.c.l.bf16 %v1496
        %v1513 = vunpack.c.l.bf16 %v1497
        %1530 = vrot.lane.b32.xlu0 %v1498, 16
        %v1531 = vpop.permute.xlu0 %1530
        %1532 = vrot.lane.b32.xlu0 %v1499, 16
        %v1533 = vpop.permute.xlu0 %1532
        %1534 = vrot.lane.b32.xlu0 %v1500, 16
        %v1535 = vpop.permute.xlu0 %1534
        %1536 = vrot.lane.b32.xlu0 %v1501, 16
        %v1537 = vpop.permute.xlu0 %1536
        %1538 = vrot.lane.b32.xlu0 %v1502, 16
        %v1539 = vpop.permute.xlu0 %1538
        %1540 = vrot.lane.b32.xlu0 %v1503, 16
        %v1541 = vpop.permute.xlu0 %1540
        %1542 = vrot.lane.b32.xlu0 %v1504, 16
        %v1543 = vpop.permute.xlu0 %1542
        %1544 = vrot.lane.b32.xlu0 %v1505, 16
        %v1545 = vpop.permute.xlu0 %1544
        %1546 = vrot.lane.b32.xlu0 %v1506, 16
        %v1547 = vpop.permute.xlu0 %1546
        %1548 = vrot.lane.b32.xlu0 %v1507, 16
        %v1549 = vpop.permute.xlu0 %1548
        %1550 = vrot.lane.b32.xlu0 %v1508, 16
        %v1551 = vpop.permute.xlu0 %1550
        %1552 = vrot.lane.b32.xlu0 %v1509, 16
        %v1553 = vpop.permute.xlu0 %1552
        %1554 = vrot.lane.b32.xlu0 %v1510, 16
        %v1555 = vpop.permute.xlu0 %1554
        %1556 = vrot.lane.b32.xlu0 %v1511, 16
        %v1557 = vpop.permute.xlu0 %1556
        %1558 = vrot.lane.b32.xlu0 %v1512, 16
        %v1559 = vpop.permute.xlu0 %1558
        %1560 = vrot.lane.b32.xlu0 %v1513, 16
        %v1561 = vpop.permute.xlu0 %1560
        %1578 = vrot.lane.b32.xlu0 %v1498, 32
        %v1579 = vpop.permute.xlu0 %1578
        %1580 = vrot.lane.b32.xlu0 %v1499, 32
        %v1581 = vpop.permute.xlu0 %1580
        %1582 = vrot.lane.b32.xlu0 %v1500, 32
        %v1583 = vpop.permute.xlu0 %1582
        %1584 = vrot.lane.b32.xlu0 %v1501, 32
        %v1585 = vpop.permute.xlu0 %1584
        %1586 = vrot.lane.b32.xlu0 %v1502, 32
        %v1587 = vpop.permute.xlu0 %1586
        %1588 = vrot.lane.b32.xlu0 %v1503, 32
        %v1589 = vpop.permute.xlu0 %1588
        %1590 = vrot.lane.b32.xlu0 %v1504, 32
        %v1591 = vpop.permute.xlu0 %1590
        %1592 = vrot.lane.b32.xlu0 %v1505, 32
        %v1593 = vpop.permute.xlu0 %1592
        %1594 = vrot.lane.b32.xlu0 %v1506, 32
        %v1595 = vpop.permute.xlu0 %1594
        %1596 = vrot.lane.b32.xlu0 %v1507, 32
        %v1597 = vpop.permute.xlu0 %1596
        %1598 = vrot.lane.b32.xlu0 %v1508, 32
        %v1599 = vpop.permute.xlu0 %1598
        %1600 = vrot.lane.b32.xlu0 %v1509, 32
        %v1601 = vpop.permute.xlu0 %1600
        %1602 = vrot.lane.b32.xlu0 %v1510, 32
        %v1603 = vpop.permute.xlu0 %1602
        %1604 = vrot.lane.b32.xlu0 %v1511, 32
        %v1605 = vpop.permute.xlu0 %1604
        %1606 = vrot.lane.b32.xlu0 %v1512, 32
        %v1607 = vpop.permute.xlu0 %1606
        %1608 = vrot.lane.b32.xlu0 %v1513, 32
        %v1609 = vpop.permute.xlu0 %1608
        %1626 = vrot.lane.b32.xlu0 %v1498, 48
        %v1627 = vpop.permute.xlu0 %1626
        %1628 = vrot.lane.b32.xlu0 %v1499, 48
        %v1629 = vpop.permute.xlu0 %1628
        %1630 = vrot.lane.b32.xlu0 %v1500, 48
        %v1631 = vpop.permute.xlu0 %1630
        %1632 = vrot.lane.b32.xlu0 %v1501, 48
        %v1633 = vpop.permute.xlu0 %1632
        %1634 = vrot.lane.b32.xlu0 %v1502, 48
        %v1635 = vpop.permute.xlu0 %1634
        %1636 = vrot.lane.b32.xlu0 %v1503, 48
        %v1637 = vpop.permute.xlu0 %1636
        %1638 = vrot.lane.b32.xlu0 %v1504, 48
        %v1639 = vpop.permute.xlu0 %1638
        %1640 = vrot.lane.b32.xlu0 %v1505, 48
        %v1641 = vpop.permute.xlu0 %1640
        %1642 = vrot.lane.b32.xlu0 %v1506, 48
        %v1643 = vpop.permute.xlu0 %1642
        %1644 = vrot.lane.b32.xlu0 %v1507, 48
        %v1645 = vpop.permute.xlu0 %1644
        %1646 = vrot.lane.b32.xlu0 %v1508, 48
        %v1647 = vpop.permute.xlu0 %1646
        %1648 = vrot.lane.b32.xlu0 %v1509, 48
        %v1649 = vpop.permute.xlu0 %1648
        %1650 = vrot.lane.b32.xlu0 %v1510, 48
        %v1651 = vpop.permute.xlu0 %1650
        %1652 = vrot.lane.b32.xlu0 %v1511, 48
        %v1653 = vpop.permute.xlu0 %1652
        %1654 = vrot.lane.b32.xlu0 %v1512, 48
        %v1655 = vpop.permute.xlu0 %1654
        %1656 = vrot.lane.b32.xlu0 %v1513, 48
        %v1657 = vpop.permute.xlu0 %1656
        %1674 = vrot.lane.b32.xlu0 %v1498, 64
        %v1675 = vpop.permute.xlu0 %1674
        %1676 = vrot.lane.b32.xlu0 %v1499, 64
        %v1677 = vpop.permute.xlu0 %1676
        %1678 = vrot.lane.b32.xlu0 %v1500, 64
        %v1679 = vpop.permute.xlu0 %1678
        %1680 = vrot.lane.b32.xlu0 %v1501, 64
        %v1681 = vpop.permute.xlu0 %1680
        %1682 = vrot.lane.b32.xlu0 %v1502, 64
        %v1683 = vpop.permute.xlu0 %1682
        %1684 = vrot.lane.b32.xlu0 %v1503, 64
        %v1685 = vpop.permute.xlu0 %1684
        %1686 = vrot.lane.b32.xlu0 %v1504, 64
        %v1687 = vpop.permute.xlu0 %1686
        %1688 = vrot.lane.b32.xlu0 %v1505, 64
        %v1689 = vpop.permute.xlu0 %1688
        %1690 = vrot.lane.b32.xlu0 %v1506, 64
        %v1691 = vpop.permute.xlu0 %1690
        %1692 = vrot.lane.b32.xlu0 %v1507, 64
        %v1693 = vpop.permute.xlu0 %1692
        %1694 = vrot.lane.b32.xlu0 %v1508, 64
        %v1695 = vpop.permute.xlu0 %1694
        %1696 = vrot.lane.b32.xlu0 %v1509, 64
        %v1697 = vpop.permute.xlu0 %1696
        %1698 = vrot.lane.b32.xlu0 %v1510, 64
        %v1699 = vpop.permute.xlu0 %1698
        %1700 = vrot.lane.b32.xlu0 %v1511, 64
        %v1701 = vpop.permute.xlu0 %1700
        %1702 = vrot.lane.b32.xlu0 %v1512, 64
        %v1703 = vpop.permute.xlu0 %1702
        %1704 = vrot.lane.b32.xlu0 %v1513, 64
        %v1705 = vpop.permute.xlu0 %1704
        %1722 = vrot.lane.b32.xlu0 %v1498, 80
        %v1723 = vpop.permute.xlu0 %1722
        %1724 = vrot.lane.b32.xlu0 %v1499, 80
        %v1725 = vpop.permute.xlu0 %1724
        %1726 = vrot.lane.b32.xlu0 %v1500, 80
        %v1727 = vpop.permute.xlu0 %1726
        %1728 = vrot.lane.b32.xlu0 %v1501, 80
        %v1729 = vpop.permute.xlu0 %1728
        %1730 = vrot.lane.b32.xlu0 %v1502, 80
        %v1731 = vpop.permute.xlu0 %1730
        %1732 = vrot.lane.b32.xlu0 %v1503, 80
        %v1733 = vpop.permute.xlu0 %1732
        %1734 = vrot.lane.b32.xlu0 %v1504, 80
        %v1735 = vpop.permute.xlu0 %1734
        %1736 = vrot.lane.b32.xlu0 %v1505, 80
        %v1737 = vpop.permute.xlu0 %1736
        %1738 = vrot.lane.b32.xlu0 %v1506, 80
        %v1739 = vpop.permute.xlu0 %1738
        %1740 = vrot.lane.b32.xlu0 %v1507, 80
        %v1741 = vpop.permute.xlu0 %1740
        %1742 = vrot.lane.b32.xlu0 %v1508, 80
        %v1743 = vpop.permute.xlu0 %1742
        %1744 = vrot.lane.b32.xlu0 %v1509, 80
        %v1745 = vpop.permute.xlu0 %1744
        %1746 = vrot.lane.b32.xlu0 %v1510, 80
        %v1747 = vpop.permute.xlu0 %1746
        %1748 = vrot.lane.b32.xlu0 %v1511, 80
        %v1749 = vpop.permute.xlu0 %1748
        %1750 = vrot.lane.b32.xlu0 %v1512, 80
        %v1751 = vpop.permute.xlu0 %1750
        %1752 = vrot.lane.b32.xlu0 %v1513, 80
        %v1753 = vpop.permute.xlu0 %1752
        %1770 = vrot.lane.b32.xlu0 %v1498, 96
        %v1771 = vpop.permute.xlu0 %1770
        %1772 = vrot.lane.b32.xlu0 %v1499, 96
        %v1773 = vpop.permute.xlu0 %1772
        %1774 = vrot.lane.b32.xlu0 %v1500, 96
        %v1775 = vpop.permute.xlu0 %1774
        %1776 = vrot.lane.b32.xlu0 %v1501, 96
        %v1777 = vpop.permute.xlu0 %1776
        %1778 = vrot.lane.b32.xlu0 %v1502, 96
        %v1779 = vpop.permute.xlu0 %1778
        %1780 = vrot.lane.b32.xlu0 %v1503, 96
        %v1781 = vpop.permute.xlu0 %1780
        %1782 = vrot.lane.b32.xlu0 %v1504, 96
        %v1783 = vpop.permute.xlu0 %1782
        %1784 = vrot.lane.b32.xlu0 %v1505, 96
        %v1785 = vpop.permute.xlu0 %1784
        %1786 = vrot.lane.b32.xlu0 %v1506, 96
        %v1787 = vpop.permute.xlu0 %1786
        %1788 = vrot.lane.b32.xlu0 %v1507, 96
        %v1789 = vpop.permute.xlu0 %1788
        %1790 = vrot.lane.b32.xlu0 %v1508, 96
        %v1791 = vpop.permute.xlu0 %1790
        %1792 = vrot.lane.b32.xlu0 %v1509, 96
        %v1793 = vpop.permute.xlu0 %1792
        %1794 = vrot.lane.b32.xlu0 %v1510, 96
        %v1795 = vpop.permute.xlu0 %1794
        %1796 = vrot.lane.b32.xlu0 %v1511, 96
        %v1797 = vpop.permute.xlu0 %1796
        %1798 = vrot.lane.b32.xlu0 %v1512, 96
        %v1799 = vpop.permute.xlu0 %1798
        %1800 = vrot.lane.b32.xlu0 %v1513, 96
        %v1801 = vpop.permute.xlu0 %1800
        %1818 = vrot.lane.b32.xlu0 %v1498, 112
        %v1819 = vpop.permute.xlu0 %1818
        %1820 = vrot.lane.b32.xlu0 %v1499, 112
        %v1821 = vpop.permute.xlu0 %1820
        %1822 = vrot.lane.b32.xlu0 %v1500, 112
        %v1823 = vpop.permute.xlu0 %1822
        %1824 = vrot.lane.b32.xlu0 %v1501, 112
        %v1825 = vpop.permute.xlu0 %1824
        %1826 = vrot.lane.b32.xlu0 %v1502, 112
        %v1827 = vpop.permute.xlu0 %1826
        %1828 = vrot.lane.b32.xlu0 %v1503, 112
        %v1829 = vpop.permute.xlu0 %1828
        %1830 = vrot.lane.b32.xlu0 %v1504, 112
        %v1831 = vpop.permute.xlu0 %1830
        %1832 = vrot.lane.b32.xlu0 %v1505, 112
        %v1833 = vpop.permute.xlu0 %1832
        %1834 = vrot.lane.b32.xlu0 %v1506, 112
        %v1835 = vpop.permute.xlu0 %1834
        %1836 = vrot.lane.b32.xlu0 %v1507, 112
        %v1837 = vpop.permute.xlu0 %1836
        %1838 = vrot.lane.b32.xlu0 %v1508, 112
        %v1839 = vpop.permute.xlu0 %1838
        %1840 = vrot.lane.b32.xlu0 %v1509, 112
        %v1841 = vpop.permute.xlu0 %1840
        %1842 = vrot.lane.b32.xlu0 %v1510, 112
        %v1843 = vpop.permute.xlu0 %1842
        %1844 = vrot.lane.b32.xlu0 %v1511, 112
        %v1845 = vpop.permute.xlu0 %1844
        %1846 = vrot.lane.b32.xlu0 %v1512, 112
        %v1847 = vpop.permute.xlu0 %1846
        %1848 = vrot.lane.b32.xlu0 %v1513, 112
        %v1849 = vpop.permute.xlu0 %1848
        %vm1866 = vcmask 130048
        %v1867 = vsel %vm1866, %v1498, %v1531
        %v1868 = vsel %vm1866, %v1499, %v1533
        %v1869 = vsel %vm1866, %v1500, %v1535
        %v1870 = vsel %vm1866, %v1501, %v1537
        %v1871 = vsel %vm1866, %v1502, %v1539
        %v1872 = vsel %vm1866, %v1503, %v1541
        %v1873 = vsel %vm1866, %v1504, %v1543
        %v1874 = vsel %vm1866, %v1505, %v1545
        %v1875 = vsel %vm1866, %v1506, %v1547
        %v1876 = vsel %vm1866, %v1507, %v1549
        %v1877 = vsel %vm1866, %v1508, %v1551
        %v1878 = vsel %vm1866, %v1509, %v1553
        %v1879 = vsel %vm1866, %v1510, %v1555
        %v1880 = vsel %vm1866, %v1511, %v1557
        %v1881 = vsel %vm1866, %v1512, %v1559
        %v1882 = vsel %vm1866, %v1513, %v1561
        %vm1883 = vcmask 261120
        %v1884 = vsel %vm1883, %v1867, %v1579
        %v1885 = vsel %vm1883, %v1868, %v1581
        %v1886 = vsel %vm1883, %v1869, %v1583
        %v1887 = vsel %vm1883, %v1870, %v1585
        %v1888 = vsel %vm1883, %v1871, %v1587
        %v1889 = vsel %vm1883, %v1872, %v1589
        %v1890 = vsel %vm1883, %v1873, %v1591
        %v1891 = vsel %vm1883, %v1874, %v1593
        %v1892 = vsel %vm1883, %v1875, %v1595
        %v1893 = vsel %vm1883, %v1876, %v1597
        %v1894 = vsel %vm1883, %v1877, %v1599
        %v1895 = vsel %vm1883, %v1878, %v1601
        %v1896 = vsel %vm1883, %v1879, %v1603
        %v1897 = vsel %vm1883, %v1880, %v1605
        %v1898 = vsel %vm1883, %v1881, %v1607
        %v1899 = vsel %vm1883, %v1882, %v1609
        %vm1900 = vcmask 392192
        %v1901 = vsel %vm1900, %v1884, %v1627
        %v1902 = vsel %vm1900, %v1885, %v1629
        %v1903 = vsel %vm1900, %v1886, %v1631
        %v1904 = vsel %vm1900, %v1887, %v1633
        %v1905 = vsel %vm1900, %v1888, %v1635
        %v1906 = vsel %vm1900, %v1889, %v1637
        %v1907 = vsel %vm1900, %v1890, %v1639
        %v1908 = vsel %vm1900, %v1891, %v1641
        %v1909 = vsel %vm1900, %v1892, %v1643
        %v1910 = vsel %vm1900, %v1893, %v1645
        %v1911 = vsel %vm1900, %v1894, %v1647
        %v1912 = vsel %vm1900, %v1895, %v1649
        %v1913 = vsel %vm1900, %v1896, %v1651
        %v1914 = vsel %vm1900, %v1897, %v1653
        %v1915 = vsel %vm1900, %v1898, %v1655
        %v1916 = vsel %vm1900, %v1899, %v1657
        %vm1917 = vcmask 523264
        %v1918 = vsel %vm1917, %v1901, %v1675
        %v1919 = vsel %vm1917, %v1902, %v1677
        %v1920 = vsel %vm1917, %v1903, %v1679
        %v1921 = vsel %vm1917, %v1904, %v1681
        %v1922 = vsel %vm1917, %v1905, %v1683
        %v1923 = vsel %vm1917, %v1906, %v1685
        %v1924 = vsel %vm1917, %v1907, %v1687
        %v1925 = vsel %vm1917, %v1908, %v1689
        %v1926 = vsel %vm1917, %v1909, %v1691
        %v1927 = vsel %vm1917, %v1910, %v1693
        %v1928 = vsel %vm1917, %v1911, %v1695
        %v1929 = vsel %vm1917, %v1912, %v1697
        %v1930 = vsel %vm1917, %v1913, %v1699
        %v1931 = vsel %vm1917, %v1914, %v1701
        %v1932 = vsel %vm1917, %v1915, %v1703
        %v1933 = vsel %vm1917, %v1916, %v1705
        %vm1934 = vcmask 654336
        %v1935 = vsel %vm1934, %v1918, %v1723
        %v1936 = vsel %vm1934, %v1919, %v1725
        %v1937 = vsel %vm1934, %v1920, %v1727
        %v1938 = vsel %vm1934, %v1921, %v1729
        %v1939 = vsel %vm1934, %v1922, %v1731
        %v1940 = vsel %vm1934, %v1923, %v1733
        %v1941 = vsel %vm1934, %v1924, %v1735
        %v1942 = vsel %vm1934, %v1925, %v1737
        %v1943 = vsel %vm1934, %v1926, %v1739
        %v1944 = vsel %vm1934, %v1927, %v1741
        %v1945 = vsel %vm1934, %v1928, %v1743
        %v1946 = vsel %vm1934, %v1929, %v1745
        %v1947 = vsel %vm1934, %v1930, %v1747
        %v1948 = vsel %vm1934, %v1931, %v1749
        %v1949 = vsel %vm1934, %v1932, %v1751
        %v1950 = vsel %vm1934, %v1933, %v1753
        %vm1951 = vcmask 785408
        %v1952 = vsel %vm1951, %v1935, %v1771
        %v1953 = vsel %vm1951, %v1936, %v1773
        %v1954 = vsel %vm1951, %v1937, %v1775
        %v1955 = vsel %vm1951, %v1938, %v1777
        %v1956 = vsel %vm1951, %v1939, %v1779
        %v1957 = vsel %vm1951, %v1940, %v1781
        %v1958 = vsel %vm1951, %v1941, %v1783
        %v1959 = vsel %vm1951, %v1942, %v1785
        %v1960 = vsel %vm1951, %v1943, %v1787
        %v1961 = vsel %vm1951, %v1944, %v1789
        %v1962 = vsel %vm1951, %v1945, %v1791
        %v1963 = vsel %vm1951, %v1946, %v1793
        %v1964 = vsel %vm1951, %v1947, %v1795
        %v1965 = vsel %vm1951, %v1948, %v1797
        %v1966 = vsel %vm1951, %v1949, %v1799
        %v1967 = vsel %vm1951, %v1950, %v1801
        %vm1968 = vcmask 916480
        %v1969 = vsel %vm1968, %v1952, %v1819
        %v1970 = vsel %vm1968, %v1953, %v1821
        %v1971 = vsel %vm1968, %v1954, %v1823
        %v1972 = vsel %vm1968, %v1955, %v1825
        %v1973 = vsel %vm1968, %v1956, %v1827
        %v1974 = vsel %vm1968, %v1957, %v1829
        %v1975 = vsel %vm1968, %v1958, %v1831
        %v1976 = vsel %vm1968, %v1959, %v1833
        %v1977 = vsel %vm1968, %v1960, %v1835
        %v1978 = vsel %vm1968, %v1961, %v1837
        %v1979 = vsel %vm1968, %v1962, %v1839
        %v1980 = vsel %vm1968, %v1963, %v1841
        %v1981 = vsel %vm1968, %v1964, %v1843
        %v1982 = vsel %vm1968, %v1965, %v1845
        %v1983 = vsel %vm1968, %v1966, %v1847
        %v1984 = vsel %vm1968, %v1967, %v1849
        %v1985 = vmul.f32 %v1450, %v1969
        %v1986 = vmul.f32 %v1451, %v1969
        %v1987 = vmul.f32 %v1452, %v1970
        %v1988 = vmul.f32 %v1453, %v1970
        %v1989 = vmul.f32 %v1454, %v1971
        %v1990 = vmul.f32 %v1455, %v1971
        %v1991 = vmul.f32 %v1456, %v1972
        %v1992 = vmul.f32 %v1457, %v1972
        %v1993 = vmul.f32 %v1458, %v1973
        %v1994 = vmul.f32 %v1459, %v1973
        %v1995 = vmul.f32 %v1460, %v1974
        %v1996 = vmul.f32 %v1461, %v1974
        %v1997 = vmul.f32 %v1462, %v1975
        %v1998 = vmul.f32 %v1463, %v1975
        %v1999 = vmul.f32 %v1464, %v1976
        %v2000 = vmul.f32 %v1465, %v1976
        %v2001 = vmul.f32 %v1466, %v1977
        %v2002 = vmul.f32 %v1467, %v1977
        %v2003 = vmul.f32 %v1468, %v1978
        %v2004 = vmul.f32 %v1469, %v1978
        %v2005 = vmul.f32 %v1470, %v1979
        %v2006 = vmul.f32 %v1471, %v1979
        %v2007 = vmul.f32 %v1472, %v1980
        %v2008 = vmul.f32 %v1473, %v1980
        %v2009 = vmul.f32 %v1474, %v1981
        %v2010 = vmul.f32 %v1475, %v1981
        %v2011 = vmul.f32 %v1476, %v1982
        %v2012 = vmul.f32 %v1477, %v1982
        %v2013 = vmul.f32 %v1478, %v1983
        %v2014 = vmul.f32 %v1479, %v1983
        %v2015 = vmul.f32 %v1480, %v1984
        %v2016 = vmul.f32 %v1481, %v1984
        %v2017 = vrot.slane %v1985, 4
        %v2018 = vadd.f32 %v1985, %v2017
        %v2019 = vrot.slane %v2018, 2
        %v2020 = vadd.f32 %v2018, %v2019
        %v2021 = vrot.slane %v2020, 1
        %v2022 = vadd.f32 %v2020, %v2021
        %v2023 = vrot.slane %v1986, 4
        %v2024 = vadd.f32 %v1986, %v2023
        %v2025 = vrot.slane %v2024, 2
        %v2026 = vadd.f32 %v2024, %v2025
        %v2027 = vrot.slane %v2026, 1
        %v2028 = vadd.f32 %v2026, %v2027
        %v2029 = vrot.slane %v1987, 4
        %v2030 = vadd.f32 %v1987, %v2029
        %v2031 = vrot.slane %v2030, 2
        %v2032 = vadd.f32 %v2030, %v2031
        %v2033 = vrot.slane %v2032, 1
        %v2034 = vadd.f32 %v2032, %v2033
        %v2035 = vrot.slane %v1988, 4
        %v2036 = vadd.f32 %v1988, %v2035
        %v2037 = vrot.slane %v2036, 2
        %v2038 = vadd.f32 %v2036, %v2037
        %v2039 = vrot.slane %v2038, 1
        %v2040 = vadd.f32 %v2038, %v2039
        %v2041 = vrot.slane %v1989, 4
        %v2042 = vadd.f32 %v1989, %v2041
        %v2043 = vrot.slane %v2042, 2
        %v2044 = vadd.f32 %v2042, %v2043
        %v2045 = vrot.slane %v2044, 1
        %v2046 = vadd.f32 %v2044, %v2045
        %v2047 = vrot.slane %v1990, 4
        %v2048 = vadd.f32 %v1990, %v2047
        %v2049 = vrot.slane %v2048, 2
        %v2050 = vadd.f32 %v2048, %v2049
        %v2051 = vrot.slane %v2050, 1
        %v2052 = vadd.f32 %v2050, %v2051
        %v2053 = vrot.slane %v1991, 4
        %v2054 = vadd.f32 %v1991, %v2053
        %v2055 = vrot.slane %v2054, 2
        %v2056 = vadd.f32 %v2054, %v2055
        %v2057 = vrot.slane %v2056, 1
        %v2058 = vadd.f32 %v2056, %v2057
        %v2059 = vrot.slane %v1992, 4
        %v2060 = vadd.f32 %v1992, %v2059
        %v2061 = vrot.slane %v2060, 2
        %v2062 = vadd.f32 %v2060, %v2061
        %v2063 = vrot.slane %v2062, 1
        %v2064 = vadd.f32 %v2062, %v2063
        %v2065 = vrot.slane %v1993, 4
        %v2066 = vadd.f32 %v1993, %v2065
        %v2067 = vrot.slane %v2066, 2
        %v2068 = vadd.f32 %v2066, %v2067
        %v2069 = vrot.slane %v2068, 1
        %v2070 = vadd.f32 %v2068, %v2069
        %v2071 = vrot.slane %v1994, 4
        %v2072 = vadd.f32 %v1994, %v2071
        %v2073 = vrot.slane %v2072, 2
        %v2074 = vadd.f32 %v2072, %v2073
        %v2075 = vrot.slane %v2074, 1
        %v2076 = vadd.f32 %v2074, %v2075
        %v2077 = vrot.slane %v1995, 4
        %v2078 = vadd.f32 %v1995, %v2077
        %v2079 = vrot.slane %v2078, 2
        %v2080 = vadd.f32 %v2078, %v2079
        %v2081 = vrot.slane %v2080, 1
        %v2082 = vadd.f32 %v2080, %v2081
        %v2083 = vrot.slane %v1996, 4
        %v2084 = vadd.f32 %v1996, %v2083
        %v2085 = vrot.slane %v2084, 2
        %v2086 = vadd.f32 %v2084, %v2085
        %v2087 = vrot.slane %v2086, 1
        %v2088 = vadd.f32 %v2086, %v2087
        %v2089 = vrot.slane %v1997, 4
        %v2090 = vadd.f32 %v1997, %v2089
        %v2091 = vrot.slane %v2090, 2
        %v2092 = vadd.f32 %v2090, %v2091
        %v2093 = vrot.slane %v2092, 1
        %v2094 = vadd.f32 %v2092, %v2093
        %v2095 = vrot.slane %v1998, 4
        %v2096 = vadd.f32 %v1998, %v2095
        %v2097 = vrot.slane %v2096, 2
        %v2098 = vadd.f32 %v2096, %v2097
        %v2099 = vrot.slane %v2098, 1
        %v2100 = vadd.f32 %v2098, %v2099
        %v2101 = vrot.slane %v1999, 4
        %v2102 = vadd.f32 %v1999, %v2101
        %v2103 = vrot.slane %v2102, 2
        %v2104 = vadd.f32 %v2102, %v2103
        %v2105 = vrot.slane %v2104, 1
        %v2106 = vadd.f32 %v2104, %v2105
        %v2107 = vrot.slane %v2000, 4
        %v2108 = vadd.f32 %v2000, %v2107
        %v2109 = vrot.slane %v2108, 2
        %v2110 = vadd.f32 %v2108, %v2109
        %v2111 = vrot.slane %v2110, 1
        %v2112 = vadd.f32 %v2110, %v2111
        %v2113 = vrot.slane %v2001, 4
        %v2114 = vadd.f32 %v2001, %v2113
        %v2115 = vrot.slane %v2114, 2
        %v2116 = vadd.f32 %v2114, %v2115
        %v2117 = vrot.slane %v2116, 1
        %v2118 = vadd.f32 %v2116, %v2117
        %v2119 = vrot.slane %v2002, 4
        %v2120 = vadd.f32 %v2002, %v2119
        %v2121 = vrot.slane %v2120, 2
        %v2122 = vadd.f32 %v2120, %v2121
        %v2123 = vrot.slane %v2122, 1
        %v2124 = vadd.f32 %v2122, %v2123
        %v2125 = vrot.slane %v2003, 4
        %v2126 = vadd.f32 %v2003, %v2125
        %v2127 = vrot.slane %v2126, 2
        %v2128 = vadd.f32 %v2126, %v2127
        %v2129 = vrot.slane %v2128, 1
        %v2130 = vadd.f32 %v2128, %v2129
        %v2131 = vrot.slane %v2004, 4
        %v2132 = vadd.f32 %v2004, %v2131
        %v2133 = vrot.slane %v2132, 2
        %v2134 = vadd.f32 %v2132, %v2133
        %v2135 = vrot.slane %v2134, 1
        %v2136 = vadd.f32 %v2134, %v2135
        %v2137 = vrot.slane %v2005, 4
        %v2138 = vadd.f32 %v2005, %v2137
        %v2139 = vrot.slane %v2138, 2
        %v2140 = vadd.f32 %v2138, %v2139
        %v2141 = vrot.slane %v2140, 1
        %v2142 = vadd.f32 %v2140, %v2141
        %v2143 = vrot.slane %v2006, 4
        %v2144 = vadd.f32 %v2006, %v2143
        %v2145 = vrot.slane %v2144, 2
        %v2146 = vadd.f32 %v2144, %v2145
        %v2147 = vrot.slane %v2146, 1
        %v2148 = vadd.f32 %v2146, %v2147
        %v2149 = vrot.slane %v2007, 4
        %v2150 = vadd.f32 %v2007, %v2149
        %v2151 = vrot.slane %v2150, 2
        %v2152 = vadd.f32 %v2150, %v2151
        %v2153 = vrot.slane %v2152, 1
        %v2154 = vadd.f32 %v2152, %v2153
        %v2155 = vrot.slane %v2008, 4
        %v2156 = vadd.f32 %v2008, %v2155
        %v2157 = vrot.slane %v2156, 2
        %v2158 = vadd.f32 %v2156, %v2157
        %v2159 = vrot.slane %v2158, 1
        %v2160 = vadd.f32 %v2158, %v2159
        %v2161 = vrot.slane %v2009, 4
        %v2162 = vadd.f32 %v2009, %v2161
        %v2163 = vrot.slane %v2162, 2
        %v2164 = vadd.f32 %v2162, %v2163
        %v2165 = vrot.slane %v2164, 1
        %v2166 = vadd.f32 %v2164, %v2165
        %v2167 = vrot.slane %v2010, 4
        %v2168 = vadd.f32 %v2010, %v2167
        %v2169 = vrot.slane %v2168, 2
        %v2170 = vadd.f32 %v2168, %v2169
        %v2171 = vrot.slane %v2170, 1
        %v2172 = vadd.f32 %v2170, %v2171
        %v2173 = vrot.slane %v2011, 4
        %v2174 = vadd.f32 %v2011, %v2173
        %v2175 = vrot.slane %v2174, 2
        %v2176 = vadd.f32 %v2174, %v2175
        %v2177 = vrot.slane %v2176, 1
        %v2178 = vadd.f32 %v2176, %v2177
        %v2179 = vrot.slane %v2012, 4
        %v2180 = vadd.f32 %v2012, %v2179
        %v2181 = vrot.slane %v2180, 2
        %v2182 = vadd.f32 %v2180, %v2181
        %v2183 = vrot.slane %v2182, 1
        %v2184 = vadd.f32 %v2182, %v2183
        %v2185 = vrot.slane %v2013, 4
        %v2186 = vadd.f32 %v2013, %v2185
        %v2187 = vrot.slane %v2186, 2
        %v2188 = vadd.f32 %v2186, %v2187
        %v2189 = vrot.slane %v2188, 1
        %v2190 = vadd.f32 %v2188, %v2189
        %v2191 = vrot.slane %v2014, 4
        %v2192 = vadd.f32 %v2014, %v2191
        %v2193 = vrot.slane %v2192, 2
        %v2194 = vadd.f32 %v2192, %v2193
        %v2195 = vrot.slane %v2194, 1
        %v2196 = vadd.f32 %v2194, %v2195
        %v2197 = vrot.slane %v2015, 4
        %v2198 = vadd.f32 %v2015, %v2197
        %v2199 = vrot.slane %v2198, 2
        %v2200 = vadd.f32 %v2198, %v2199
        %v2201 = vrot.slane %v2200, 1
        %v2202 = vadd.f32 %v2200, %v2201
        %v2203 = vrot.slane %v2016, 4
        %v2204 = vadd.f32 %v2016, %v2203
        %v2205 = vrot.slane %v2204, 2
        %v2206 = vadd.f32 %v2204, %v2205
        %v2207 = vrot.slane %v2206, 1
        %v2208 = vadd.f32 %v2206, %v2207
        %v2209 = vpack.c.bf16 %v2022, %v2022
        %v2210 = vpack.c.bf16 %v2028, %v2028
        %v2211 = vpack.c.bf16 %v2034, %v2034
        %v2212 = vpack.c.bf16 %v2040, %v2040
        %v2213 = vpack.c.bf16 %v2046, %v2046
        %v2214 = vpack.c.bf16 %v2052, %v2052
        %v2215 = vpack.c.bf16 %v2058, %v2058
        %v2216 = vpack.c.bf16 %v2064, %v2064
        %v2217 = vpack.c.bf16 %v2070, %v2070
        %v2218 = vpack.c.bf16 %v2076, %v2076
        %v2219 = vpack.c.bf16 %v2082, %v2082
        %v2220 = vpack.c.bf16 %v2088, %v2088
        %v2221 = vpack.c.bf16 %v2094, %v2094
        %v2222 = vpack.c.bf16 %v2100, %v2100
        %v2223 = vpack.c.bf16 %v2106, %v2106
        %v2224 = vpack.c.bf16 %v2112, %v2112
        %v2225 = vpack.c.bf16 %v2118, %v2118
        %v2226 = vpack.c.bf16 %v2124, %v2124
        %v2227 = vpack.c.bf16 %v2130, %v2130
        %v2228 = vpack.c.bf16 %v2136, %v2136
        %v2229 = vpack.c.bf16 %v2142, %v2142
        %v2230 = vpack.c.bf16 %v2148, %v2148
        %v2231 = vpack.c.bf16 %v2154, %v2154
        %v2232 = vpack.c.bf16 %v2160, %v2160
        %v2233 = vpack.c.bf16 %v2166, %v2166
        %v2234 = vpack.c.bf16 %v2172, %v2172
        %v2235 = vpack.c.bf16 %v2178, %v2178
        %v2236 = vpack.c.bf16 %v2184, %v2184
        %v2237 = vpack.c.bf16 %v2190, %v2190
        %v2238 = vpack.c.bf16 %v2196, %v2196
        %v2239 = vpack.c.bf16 %v2202, %v2202
        %v2240 = vpack.c.bf16 %v2208, %v2208
        %v2241 = vld [vmem:[%s4] sm:$0xf]
        %v2242 = vld [vmem:[%s4 + $0x4] sm:$0xf]
        %v2243 = vld [vmem:[%s4 + $0x8] sm:$0xf]
        %v2244 = vld [vmem:[%s4 + $0xc] sm:$0xf]
        %v2245 = vld [vmem:[%s4 + $0x10] sm:$0xf]
        %v2246 = vld [vmem:[%s4 + $0x14] sm:$0xf]
        %v2247 = vld [vmem:[%s4 + $0x18] sm:$0xf]
        %v2248 = vld [vmem:[%s4 + $0x1c] sm:$0xf]
        %v2249 = vld [vmem:[%s4 + $0x20] sm:$0xf]
        %v2250 = vld [vmem:[%s4 + $0x24] sm:$0xf]
        %v2251 = vld [vmem:[%s4 + $0x28] sm:$0xf]
        %v2252 = vld [vmem:[%s4 + $0x2c] sm:$0xf]
        %v2253 = vld [vmem:[%s4 + $0x30] sm:$0xf]
        %v2254 = vld [vmem:[%s4 + $0x34] sm:$0xf]
        %v2255 = vld [vmem:[%s4 + $0x38] sm:$0xf]
        %v2256 = vld [vmem:[%s4 + $0x3c] sm:$0xf]
        %v2257 = vld [vmem:[%s4 + $0x40] sm:$0xf]
        %v2258 = vld [vmem:[%s4 + $0x44] sm:$0xf]
        %v2259 = vld [vmem:[%s4 + $0x48] sm:$0xf]
        %v2260 = vld [vmem:[%s4 + $0x4c] sm:$0xf]
        %v2261 = vld [vmem:[%s4 + $0x50] sm:$0xf]
        %v2262 = vld [vmem:[%s4 + $0x54] sm:$0xf]
        %v2263 = vld [vmem:[%s4 + $0x58] sm:$0xf]
        %v2264 = vld [vmem:[%s4 + $0x5c] sm:$0xf]
        %v2265 = vld [vmem:[%s4 + $0x60] sm:$0xf]
        %v2266 = vld [vmem:[%s4 + $0x64] sm:$0xf]
        %v2267 = vld [vmem:[%s4 + $0x68] sm:$0xf]
        %v2268 = vld [vmem:[%s4 + $0x6c] sm:$0xf]
        %v2269 = vld [vmem:[%s4 + $0x70] sm:$0xf]
        %v2270 = vld [vmem:[%s4 + $0x74] sm:$0xf]
        %v2271 = vld [vmem:[%s4 + $0x78] sm:$0xf]
        %v2272 = vld [vmem:[%s4 + $0x7c] sm:$0xf]
        %v2305 = vunpack.c.l.b16 %v2209
        %v2306 = vunpack.c.l.b16 %v2210
        %v2307 = vunpack.c.l.b16 %v2211
        %v2308 = vunpack.c.l.b16 %v2212
        %v2309 = vunpack.c.l.b16 %v2213
        %v2310 = vunpack.c.l.b16 %v2214
        %v2311 = vunpack.c.l.b16 %v2215
        %v2312 = vunpack.c.l.b16 %v2216
        %v2313 = vunpack.c.l.b16 %v2217
        %v2314 = vunpack.c.l.b16 %v2218
        %v2315 = vunpack.c.l.b16 %v2219
        %v2316 = vunpack.c.l.b16 %v2220
        %v2317 = vunpack.c.l.b16 %v2221
        %v2318 = vunpack.c.l.b16 %v2222
        %v2319 = vunpack.c.l.b16 %v2223
        %v2320 = vunpack.c.l.b16 %v2224
        %v2321 = vunpack.c.l.b16 %v2225
        %v2322 = vunpack.c.l.b16 %v2226
        %v2323 = vunpack.c.l.b16 %v2227
        %v2324 = vunpack.c.l.b16 %v2228
        %v2325 = vunpack.c.l.b16 %v2229
        %v2326 = vunpack.c.l.b16 %v2230
        %v2327 = vunpack.c.l.b16 %v2231
        %v2328 = vunpack.c.l.b16 %v2232
        %v2329 = vunpack.c.l.b16 %v2233
        %v2330 = vunpack.c.l.b16 %v2234
        %v2331 = vunpack.c.l.b16 %v2235
        %v2332 = vunpack.c.l.b16 %v2236
        %v2333 = vunpack.c.l.b16 %v2237
        %v2334 = vunpack.c.l.b16 %v2238
        %v2335 = vunpack.c.l.b16 %v2239
        %v2336 = vunpack.c.l.b16 %v2240
        %vm2337 = vcmask 1041409
        %v2338 = vsel %vm2337, %v2307, %v2305
        %vm2339 = vcmask 1042434
        %v2340 = vsel %vm2339, %v2309, %v2338
        %vm2341 = vcmask 1043459
        %v2342 = vsel %vm2341, %v2311, %v2340
        %vm2343 = vcmask 1044484
        %v2344 = vsel %vm2343, %v2313, %v2342
        %vm2345 = vcmask 1045509
        %v2346 = vsel %vm2345, %v2315, %v2344
        %vm2347 = vcmask 1046534
        %v2348 = vsel %vm2347, %v2317, %v2346
        %vm2349 = vcmask 1047559
        %v2350 = vsel %vm2349, %v2319, %v2348
        %v2351 = vsel %vm2337, %v2308, %v2306
        %v2352 = vsel %vm2339, %v2310, %v2351
        %v2353 = vsel %vm2341, %v2312, %v2352
        %v2354 = vsel %vm2343, %v2314, %v2353
        %v2355 = vsel %vm2345, %v2316, %v2354
        %v2356 = vsel %vm2347, %v2318, %v2355
        %v2357 = vsel %vm2349, %v2320, %v2356
        %v2358 = vsel %vm2337, %v2323, %v2321
        %v2359 = vsel %vm2339, %v2325, %v2358
        %v2360 = vsel %vm2341, %v2327, %v2359
        %v2361 = vsel %vm2343, %v2329, %v2360
        %v2362 = vsel %vm2345, %v2331, %v2361
        %v2363 = vsel %vm2347, %v2333, %v2362
        %v2364 = vsel %vm2349, %v2335, %v2363
        %v2365 = vsel %vm2337, %v2324, %v2322
        %v2366 = vsel %vm2339, %v2326, %v2365
        %v2367 = vsel %vm2341, %v2328, %v2366
        %v2368 = vsel %vm2343, %v2330, %v2367
        %v2369 = vsel %vm2345, %v2332, %v2368
        %v2370 = vsel %vm2347, %v2334, %v2369
        %v2371 = vsel %vm2349, %v2336, %v2370
        %v2372 = vpack.c.b16 %v2364, %v2350
        %v2373 = vpack.c.b16 %v2371, %v2357
        %v2408 = vunpack.c.l.b16 %v2241
        %v2409 = vunpack.c.l.b16 %v2242
        %v2410 = vunpack.c.l.b16 %v2243
        %v2411 = vunpack.c.l.b16 %v2244
        %v2412 = vunpack.c.l.b16 %v2245
        %v2413 = vunpack.c.l.b16 %v2246
        %v2414 = vunpack.c.l.b16 %v2247
        %v2415 = vunpack.c.l.b16 %v2248
        %v2416 = vunpack.c.l.b16 %v2249
        %v2417 = vunpack.c.l.b16 %v2250
        %v2418 = vunpack.c.l.b16 %v2251
        %v2419 = vunpack.c.l.b16 %v2252
        %v2420 = vunpack.c.l.b16 %v2253
        %v2421 = vunpack.c.l.b16 %v2254
        %v2422 = vunpack.c.l.b16 %v2255
        %v2423 = vunpack.c.l.b16 %v2256
        %v2424 = vunpack.c.l.b16 %v2257
        %v2425 = vunpack.c.l.b16 %v2258
        %v2426 = vunpack.c.l.b16 %v2259
        %v2427 = vunpack.c.l.b16 %v2260
        %v2428 = vunpack.c.l.b16 %v2261
        %v2429 = vunpack.c.l.b16 %v2262
        %v2430 = vunpack.c.l.b16 %v2263
        %v2431 = vunpack.c.l.b16 %v2264
        %v2432 = vunpack.c.l.b16 %v2265
        %v2433 = vunpack.c.l.b16 %v2266
        %v2434 = vunpack.c.l.b16 %v2267
        %v2435 = vunpack.c.l.b16 %v2268
        %v2436 = vunpack.c.l.b16 %v2269
        %v2437 = vunpack.c.l.b16 %v2270
        %v2438 = vunpack.c.l.b16 %v2271
        %v2439 = vunpack.c.l.b16 %v2272
        %v2440 = vpack.c.b16 %v2409, %v2408
        %v2441 = vpack.c.b16 %v2411, %v2410
        %v2442 = vpack.c.b16 %v2413, %v2412
        %v2443 = vpack.c.b16 %v2415, %v2414
        %v2444 = vpack.c.b16 %v2417, %v2416
        %v2445 = vpack.c.b16 %v2419, %v2418
        %v2446 = vpack.c.b16 %v2421, %v2420
        %v2447 = vpack.c.b16 %v2423, %v2422
        %v2448 = vpack.c.b16 %v2425, %v2424
        %v2449 = vpack.c.b16 %v2427, %v2426
        %v2450 = vpack.c.b16 %v2429, %v2428
        %v2451 = vpack.c.b16 %v2431, %v2430
        %v2452 = vpack.c.b16 %v2433, %v2432
        %v2453 = vpack.c.b16 %v2435, %v2434
        %v2454 = vpack.c.b16 %v2437, %v2436
        %v2455 = vpack.c.b16 %v2439, %v2438
        %2472 = vmatprep.subr.bf16.mxu0 0
        %2473 = vmatpush1.bf16.msra.mxu0 %v2440
        %2474 = vmatprep.subr.bf16.mxu0 0
        %2475 = vmatpush1.bf16.msra.mxu0 %v2441
        %2476 = vmatprep.subr.bf16.mxu0 0
        %2477 = vmatpush1.bf16.msra.mxu0 %v2442
        %2478 = vmatprep.subr.bf16.mxu0 0
        %2479 = vmatpush1.bf16.msra.mxu0 %v2443
        %2480 = vmatprep.subr.bf16.mxu0 0
        %2481 = vmatpush1.bf16.msra.mxu0 %v2444
        %2482 = vmatprep.subr.bf16.mxu0 0
        %2483 = vmatpush1.bf16.msra.mxu0 %v2445
        %2484 = vmatprep.subr.bf16.mxu0 0
        %2485 = vmatpush1.bf16.msra.mxu0 %v2446
        %2486 = vmatprep.subr.bf16.mxu0 0
        %2487 = vmatpush1.bf16.msra.mxu0 %v2447
        %2488 = vmatprep.subr.bf16.mxu0 0
        %2489 = vmatpush1.bf16.msra.mxu0 %v2448
        %2490 = vmatprep.subr.bf16.mxu0 0
        %2491 = vmatpush1.bf16.msra.mxu0 %v2449
        %2492 = vmatprep.subr.bf16.mxu0 0
        %2493 = vmatpush1.bf16.msra.mxu0 %v2450
        %2494 = vmatprep.subr.bf16.mxu0 0
        %2495 = vmatpush1.bf16.msra.mxu0 %v2451
        %2496 = vmatprep.subr.bf16.mxu0 0
        %2497 = vmatpush1.bf16.msra.mxu0 %v2452
        %2498 = vmatprep.subr.bf16.mxu0 0
        %2499 = vmatpush1.bf16.msra.mxu0 %v2453
        %2500 = vmatprep.subr.bf16.mxu0 0
        %2501 = vmatpush1.bf16.msra.mxu0 %v2454
        %2502 = vmatprep.subr.bf16.mxu0 0
        %2503 = vmatpush1.bf16.msra.mxu0 %v2455
        %2504 = vmatprep.mubr.bf16.mxu0 %v2373
        %2505 = vmatmul.mubr.bf16.gmra.mrb[0].mxu0 %v2372
        %v2506 = vpop.f32.mrb[0].mxu0
        %v2507 = vadd.f32 0.0, %v2506
        %v2508 = vpop.f32.mrb[0].mxu0
        %v2509 = vpop.f32.mrb[0].mxu0
        %v2510 = vadd.f32 0.0, %v2509
        %v2511 = vpop.f32.mrb[0].mxu0
        %2512 = vdwg.mxu0
        %v2513 = vld [vmem:[%s332] sm:$0xff]
        %v2514 = vld [vmem:[%s332 + $0x8] sm:$0xff]
        %2516 = vset.pattern.permute.xlu0 0
        %2517 = vperm.xlu0 %2516, %v2513
        %v2518 = vpop.permute.xlu0 %2517
        %2521 = vset.pattern.permute.xlu0 0
        %2522 = vperm.xlu0 %2521, %v2514
        %v2523 = vpop.permute.xlu0 %2522
        %v2525 = vmul.f32 %v2507, %v2518
        %v2526 = vmul.f32 %v2510, %v2523
        %v2527 = vld [vmem:[%s5] sm:$0x1]
        %v2529 = vlaneseq
        %v2530 = vshrl.u32 %v2529, 7
        %v2531 = vsub.s32 0, %v2530
        %v2532 = vrot.slane %v2527, %v2531
        %v2534 = vadd.f32 %v2525, %v2532
        %v2535 = vadd.f32 %v2526, %v2532
        %v2536 = vpack.c.bf16 %v2535, %v2534
        %v2538 = vunpack.c.l.b16 %v2536
        %v2539 = vunpack.c.h.b16 %v2536
        %v2540 = vpack.c.b16 %v2538, %v2538
        %v2541 = vpack.c.b16 %v2539, %v2539
        %2544 = vst [vmem:[%s308] sm:$0xf] %v2540
        %2545 = vst [vmem:[%s308 + $0x4] sm:$0xf] %v2541
        %s2546 = smul.u32 %s25, 16
        %v2547 = vlaneseq
        %v2548 = vshrl.u32 %v2547, 7
        %v2549 = vadd.s32 %v2548, 8
        %v2550 = vstv %s2546
        %v2551 = vadd.s32 %v2550, %v2548
        %v2552 = vadd.s32 %v2550, %v2549
        %vm2553 = vcmp.lt.s32.totalorder %v2551, 32
        %vm2554 = vcmp.lt.s32.totalorder %v2552, 32
        %v2555 = vsel %vm2553, 1, 0
        %v2556 = vsel %vm2554, 1, 0
        %vm2557 = vcmp.eq.s32.totalorder %v2555, 1
        %vm2558 = vcmp.eq.s32.totalorder %v2556, 1
        %v2559 = vsel %vm2557, %v2534, 0.0
        %v2560 = vsel %vm2558, %v2535, 0.0
        %v2561 = vadd.f32 %v2559, %v2560
        %v2562 = vrot.slane %v2561, 4
        %v2563 = vadd.f32 %v2561, %v2562
        %v2564 = vrot.slane %v2563, 2
        %v2565 = vadd.f32 %v2563, %v2564
        %v2566 = vrot.slane %v2565, 1
        %v2567 = vadd.f32 %v2565, %v2566
        %2568 = vst [vmem:[%s315] sm:$0x1] %v2567
        %v2569 = vmul.f32 %v2559, %v2559
        %v2570 = vmul.f32 %v2560, %v2560
        %v2571 = vadd.f32 %v2569, %v2570
        %v2572 = vrot.slane %v2571, 4
        %v2573 = vadd.f32 %v2571, %v2572
        %v2574 = vrot.slane %v2573, 2
        %v2575 = vadd.f32 %v2573, %v2574
        %v2576 = vrot.slane %v2575, 1
        %v2577 = vadd.f32 %v2575, %v2576
        %2578 = vst [vmem:[%s315 + $0x1] sm:$0x1] %v2577
        %s2579 = sand.u32 %s174, 1
        %s2580 = scalar_lea.sflag [#allocation3], %s2579
        %s2581 = sand.u32 %s174, 1
        %s2582 = smul.addr %s2581, 8
        %s2583 = scalar_lea.vmem [#allocation2], %s2582
        %s2584 = sand.u32 %s200, 1
        %s2585 = scalar_lea.sflag [#allocation5], %s2584
        %s2586 = sand.u32 %s200, 1
        %s2587 = smul.addr %s2586, 2
        %s2588 = scalar_lea.vmem [#allocation4], %s2587
        // Predicated region
        $region45: #{tpu_custom_call.1} parent=43 // pred_check
          %p2589 = pneg %p184
        $region46: #{tpu_custom_call.1} parent=43 // pred_check_branch
          %2591 = sbr.rel (%p2589) target = $region48
        $region47: #{tpu_custom_call.1} parent=43 // pred_region
          %s2592 = smul.u32 2, %s25
          %s2594 = ssub.s32 128, 128
          %2595 = vsyncadd %s2580, %s2594
          %s2596 = smul.addr %s2592, 64
          %s2597 = scalar_lea.hbm %s6, %s2596
          %s2598 = sshll.u32 %s2583, 4
          %s2599 = int_to_ptr.vmem [resolvable:$true] %s2598
          %2604 = dma.vmem_to_hbm [thread:$0]  %s2599, 128, %s2597, %s2580, 64, 64, 4
        $region48: #{tpu_custom_call.1} parent=43 // pred_fallthru
          _
        // Predicated region
        $region49: #{tpu_custom_call.1} parent=43 // pred_check
          %p2605 = pneg %p210
        $region50: #{tpu_custom_call.1} parent=43 // pred_check_branch
          %2607 = sbr.rel (%p2605) target = $region52
        $region51: #{tpu_custom_call.1} parent=43 // pred_region
          %s2609 = ssub.s32 32, 32
          %2610 = vsyncadd %s2585, %s2609
          %s2611 = smul.addr %s25, 32
          %s2612 = scalar_lea.hbm %s7, %s2611
          %s2614 = sshll.u32 %s2588, 4
          %s2615 = int_to_ptr.vmem [resolvable:$true] %s2614
          %2617 = dma.vmem_to_hbm [thread:$0]  %s2615, 32, %s2612, %s2585
        $region52: #{tpu_custom_call.1} parent=43 // pred_fallthru
          _
      $region44: #{tpu_custom_call.1} parent=5 // pred_fallthru
        _
      %p2618 = scmp.le.s32.totalorder 2, %s20
      // Predicated region
      $region53: #{tpu_custom_call.1} parent=5 // pred_check
        %p2619 = pneg %p2618
      $region54: #{tpu_custom_call.1} parent=5 // pred_check_branch
        %2621 = sbr.rel (%p2619) target = $region56
      $region55: #{tpu_custom_call.1} parent=5 // pred_region
        %s2622 = ssub.s32 %s20, 2
        // Predicated region
        $region57: #{tpu_custom_call.1} parent=55 // pred_check
          %p2623 = pneg %p190
        $region58: #{tpu_custom_call.1} parent=55 // pred_check_branch
          %2625 = sbr.rel (%p2623) target = $region60
        $region59: #{tpu_custom_call.1} parent=55 // pred_region
          %s2626 = sand.u32 %s175, 1
          %s2627 = scalar_lea.sflag [#allocation3], %s2626
          %s2628 = sand.u32 %s175, 1
          %s2629 = smul.addr %s2628, 8
          %s2630 = scalar_lea.vmem [#allocation2], %s2629
          %2631 = dma.done %s2627, 128
        $region60: #{tpu_custom_call.1} parent=55 // pred_fallthru
          _
        // Predicated region
        $region61: #{tpu_custom_call.1} parent=55 // pred_check
          %p2632 = pneg %p216
        $region62: #{tpu_custom_call.1} parent=55 // pred_check_branch
          %2634 = sbr.rel (%p2632) target = $region64
        $region63: #{tpu_custom_call.1} parent=55 // pred_region
          %s2635 = sand.u32 %s201, 1
          %s2636 = scalar_lea.sflag [#allocation5], %s2635
          %s2637 = sand.u32 %s201, 1
          %s2638 = smul.addr %s2637, 2
          %s2639 = scalar_lea.vmem [#allocation4], %s2638
          %2640 = dma.done %s2636, 32
        $region64: #{tpu_custom_call.1} parent=55 // pred_fallthru
          _
      $region56: #{tpu_custom_call.1} parent=5 // pred_fallthru
        _
    $region6: #{tpu_custom_call.1} parent=1 // loop_footer
      %s24 = sadd.s32 1, %s20
    $region7: #{tpu_custom_call.1} parent=1 // loop_footer_branch
      %19 = sbr.rel target = $region3
    $region8: #{tpu_custom_call.1} parent=1 // loop_exit
      _
    %2641 = vsyncpa [#allocation3], 1
    %s2642 = scalar_lea.sflag [#allocation3], 1
    %2643 = vsyncpa %s2642, 1
    %2644 = vsyncpa [#allocation5], 1
    %s2645 = scalar_lea.sflag [#allocation5], 1
    %2646 = vsyncpa %s2645, 1

</llo_original>
